<compile_context>
chip_gen: v7x
topology: tpu7x:2x2x1
jax: 0.10.0
libtpu: 0.0.40
codegen_flags: <defaults>
</compile_context>

<pallas_src>
import jax
import jax.numpy as jnp
from jax import lax
from jax.experimental import pallas as pl
from jax.experimental.pallas import tpu as pltpu


def lstm_kernel(x_ref, wih_ref, whh_ref, b_ref, hn_ref, xg_ref):
    """Whole-sequence LSTM in one invocation.

    x_ref:   (T*Bp, I)   bf16, time-major flattened input (padded batch)
    wih_ref: (I, Gp)     bf16, W_ih^T  (gate blocks [i,f,g,o], each Hp wide, zero-padded)
    whh_ref: (Hp, Gp)    bf16, W_hh^T  (zero-padded)
    b_ref:   (1, Gp)     f32,  b_ih + b_hh (zero-padded)
    hn_ref:  (Bp, Hp)    f32,  output h_T (padded)
    xg_ref:  (T*Bp, Gp)  f32 VMEM scratch: precomputed x-projection + bias, time-major
    """
    TBp, _ = x_ref.shape
    Hp, Gp = whh_ref.shape
    Bp = hn_ref.shape[0]
    T = TBp // Bp

    # --- One big GEMM: input projection (+ fused bias) for ALL timesteps, done once. ---
    xg_ref[...] = (
        jnp.dot(x_ref[...], wih_ref[...], preferred_element_type=jnp.float32)
        + b_ref[...]
    )

    whh = whh_ref[...]                                   # (Hp, Gp) bf16, loop-resident

    def step(t, carry):
        h_prev, c_prev = carry                           # f32 (Bp, Hp)
        # Contiguous, sublane-aligned (Bp, Gp) tile for timestep t (time-major slab).
        row = pl.multiple_of(t * Bp, Bp)
        g_x = xg_ref[pl.ds(row, Bp), :]                  # (Bp, Gp) f32
        gates = g_x + jnp.dot(h_prev.astype(jnp.bfloat16), whh,
                              preferred_element_type=jnp.float32)
        # Hp is a multiple of 128 -> whole-vreg lane slices (no masked selects).
        i_g = jax.nn.sigmoid(gates[:, 0 * Hp:1 * Hp])
        f_g = jax.nn.sigmoid(gates[:, 1 * Hp:2 * Hp])
        g_g = jnp.tanh(gates[:, 2 * Hp:3 * Hp])
        o_g = jax.nn.sigmoid(gates[:, 3 * Hp:4 * Hp])
        c_new = f_g * c_prev + i_g * g_g
        h_new = o_g * jnp.tanh(c_new)
        return (h_new, c_new)

    h0 = jnp.zeros((Bp, Hp), jnp.float32)
    c0 = jnp.zeros((Bp, Hp), jnp.float32)
    # Full unroll at small T; partial unroll (8) once T grows (code-size / vreg pressure).
    h_last, _ = lax.fori_loop(0, T, step, (h0, c0),
                              unroll=True if T <= 16 else 8)

    hn_ref[...] = h_last.astype(hn_ref.dtype)


def _pad_gate_cols(w_t, rows_pad, h, hp):
    """(rows, 4h) -> (rows_pad, 4hp), keeping PyTorch [i,f,g,o] block layout, zero-padded."""
    rows = w_t.shape[0]
    out = jnp.zeros((rows_pad, 4 * hp), w_t.dtype)
    for k in range(4):
        out = out.at[:rows, k * hp:k * hp + h].set(w_t[:, k * h:(k + 1) * h])
    return out


def simple_lstm_forward(x, w_ih, w_hh, b_ih, b_hh):
    """x: (B, T, I) batch_first. Returns h_n: (1, B, H) like PyTorch nn.LSTM."""
    B, T, I = x.shape
    G = w_ih.shape[0]                 # 4H
    H = G // 4

    Bp = ((B + 7) // 8) * 8           # sublane-aligned batch
    Hp = ((H + 127) // 128) * 128     # lane-aligned hidden -> whole-vreg gate slices
    Gp = 4 * Hp

    # Time-major, batch-padded, flattened, bf16 input slab (T*Bp, I).
    x_tm = jnp.transpose(x.astype(jnp.float32), (1, 0, 2))        # (T, B, I)
    x_tm = jnp.pad(x_tm, ((0, 0), (0, Bp - B), (0, 0)))           # (T, Bp, I)
    x2d = x_tm.reshape(T * Bp, I).astype(jnp.bfloat16)

    # Zero-padded, transposed weights (bf16 for MXU) and fused bias (f32).
    wih_t = _pad_gate_cols(w_ih.T.astype(jnp.float32), I, H, Hp).astype(jnp.bfloat16)   # (I, Gp)
    whh_t = _pad_gate_cols(w_hh.T.astype(jnp.float32), Hp, H, Hp).astype(jnp.bfloat16)  # (Hp, Gp)
    bias = (b_ih + b_hh).astype(jnp.float32)
    bias_p = _pad_gate_cols(bias.reshape(1, G), 1, H, Hp)                                # (1, Gp)

    h_pad = pl.pallas_call(
        lstm_kernel,
        out_shape=jax.ShapeDtypeStruct((Bp, Hp), jnp.float32),
        grid=(1,),                                   # single invocation: recurrence in-kernel
        in_specs=[
            pl.BlockSpec((T * Bp, I), lambda i: (0, 0)),   # x, time-major slab, VMEM-resident
            pl.BlockSpec((I, Gp), lambda i: (0, 0)),        # W_ih^T
            pl.BlockSpec((Hp, Gp), lambda i: (0, 0)),       # W_hh^T
            pl.BlockSpec((1, Gp), lambda i: (0, 0)),        # fused bias
        ],
        out_specs=pl.BlockSpec((Bp, Hp), lambda i: (0, 0)), # lane-dense (8,128) store
        scratch_shapes=[pltpu.VMEM((T * Bp, Gp), jnp.float32)],   # precomputed x-gates
        compiler_params=pltpu.CompilerParams(
            dimension_semantics=("arbitrary",),
            vmem_limit_bytes=64 * 1024 * 1024,
        ),
    )(x2d, wih_t, whh_t, bias_p)

    return h_pad[:B, :H][None, :, :]   # (num_layers=1, B, H)


def lstm_reference(x, w_ih, w_hh, b_ih, b_hh, mxu_dtype=jnp.float32):
    """Pure-JAX reference (lax.scan) mirroring PyTorch nn.LSTM semantics.

    mxu_dtype lets us mirror the kernel's bf16 matmul operands for a tight check.
    """
    B, T, I = x.shape
    H = w_hh.shape[1]
    wih_t = w_ih.T.astype(mxu_dtype)
    whh_t = w_hh.T.astype(mxu_dtype)
    bias = (b_ih + b_hh).astype(jnp.float32)

    def step(carry, x_t):
        h, c = carry
        gates = (jnp.dot(x_t.astype(mxu_dtype), wih_t, preferred_element_type=jnp.float32)
                 + bias
                 + jnp.dot(h.astype(mxu_dtype), whh_t, preferred_element_type=jnp.float32))
        i_g = jax.nn.sigmoid(gates[:, 0 * H:1 * H])
        f_g = jax.nn.sigmoid(gates[:, 1 * H:2 * H])
        g_g = jnp.tanh(gates[:, 2 * H:3 * H])
        o_g = jax.nn.sigmoid(gates[:, 3 * H:4 * H])
        c = f_g * c + i_g * g_g
        h = o_g * jnp.tanh(c)
        return (h, c), None

    h0 = jnp.zeros((B, H), jnp.float32)
    c0 = jnp.zeros((B, H), jnp.float32)
    (h_last, _), _ = lax.scan(step, (h0, c0),
                              jnp.transpose(x.astype(jnp.float32), (1, 0, 2)))
    return h_last[None, :, :]


if __name__ == "__main__":
    # small shapes implied by the module: (batch, seq, input_size), hidden_size
    B, T, I, H = 2, 8, 16, 32

    key = jax.random.PRNGKey(0)
    kx, k1, k2, k3, k4 = jax.random.split(key, 5)

    # deterministic init mimicking PyTorch's uniform(-1/sqrt(H), 1/sqrt(H))
    bound = 1.0 / (H ** 0.5)
    x = jax.random.normal(kx, (B, T, I), dtype=jnp.float32)
    w_ih = jax.random.uniform(k1, (4 * H, I), jnp.float32, -bound, bound)
    w_hh = jax.random.uniform(k2, (4 * H, H), jnp.float32, -bound, bound)
    b_ih = jax.random.uniform(k3, (4 * H,), jnp.float32, -bound, bound)
    b_hh = jax.random.uniform(k4, (4 * H,), jnp.float32, -bound, bound)

    h_n = jax.block_until_ready(simple_lstm_forward(x, w_ih, w_hh, b_ih, b_hh))
    assert h_n.shape == (1, B, H), h_n.shape

    # Tight check vs a reference that mirrors the kernel's bf16 MXU operands.
    h_ref_bf16 = jax.block_until_ready(
        lstm_reference(x, w_ih, w_hh, b_ih, b_hh, mxu_dtype=jnp.bfloat16))
    assert jnp.allclose(h_n, h_ref_bf16, atol=1e-4, rtol=1e-4), \
        float(jnp.max(jnp.abs(h_n - h_ref_bf16)))

    # Looser sanity check vs the pure-f32 PyTorch-semantics reference
    # (difference is only bf16 rounding of the matmul operands).
    h_ref_f32 = jax.block_until_ready(
        lstm_reference(x, w_ih, w_hh, b_ih, b_hh, mxu_dtype=jnp.float32))
    assert jnp.allclose(h_n, h_ref_f32, atol=5e-2, rtol=0.0), \
        float(jnp.max(jnp.abs(h_n - h_ref_f32)))

    print("KERNEL_OK")
</pallas_src>

<mosaic_0001>
module attributes {stable_mosaic.version = 11 : i64} {
  func.func @lstm_kernel(%arg0: i32, %arg1: memref<64x16xbf16, #tpu.memory_space<vmem>>, %arg2: memref<16x512xbf16, #tpu.memory_space<vmem>>, %arg3: memref<128x512xbf16, #tpu.memory_space<vmem>>, %arg4: memref<1x512xf32, #tpu.memory_space<vmem>>, %arg5: memref<8x128xf32, #tpu.memory_space<vmem>>, %arg6: memref<64x512xf32, #tpu.memory_space<vmem>>) attributes {dimension_semantics = [#tpu.dimension_semantics<arbitrary>], iteration_bounds = array<i64: 1>, scalar_prefetch = 0 : i64, scratch_operands = 1 : i64, tpu.core_type = #tpu.core_type<tc>, window_params = [{pipeline_mode = #tpu.pipeline_mode<synchronous>, transform_indices = @transform_0, window_bounds = array<i64: 64, 16>}, {pipeline_mode = #tpu.pipeline_mode<synchronous>, transform_indices = @transform_1, window_bounds = array<i64: 16, 512>}, {pipeline_mode = #tpu.pipeline_mode<synchronous>, transform_indices = @transform_2, window_bounds = array<i64: 128, 512>}, {pipeline_mode = #tpu.pipeline_mode<synchronous>, transform_indices = @transform_3, window_bounds = array<i64: 1, 512>}, {pipeline_mode = #tpu.pipeline_mode<synchronous>, transform_indices = @transform_4, window_bounds = array<i64: 8, 128>}]} {
    %c0 = arith.constant 0 : index
    %c0_0 = arith.constant 0 : index
    %0 = vector.load %arg1[%c0, %c0_0] : memref<64x16xbf16, #tpu.memory_space<vmem>>, vector<64x16xbf16>
    %c0_1 = arith.constant 0 : index
    %c0_2 = arith.constant 0 : index
    %1 = vector.load %arg2[%c0_1, %c0_2] : memref<16x512xbf16, #tpu.memory_space<vmem>>, vector<16x512xbf16>
    %cst = arith.constant dense<0.000000e+00> : vector<64x512xf32>
    %2 = tpu.matmul %0, %1, %cst {dimension_numbers = #tpu.dot_dimension_numbers<[1], [0], [0], [1], [0, 0, 1, 1], [], []>} : vector<64x16xbf16>, vector<16x512xbf16>, vector<64x512xf32> -> vector<64x512xf32>
    %c0_3 = arith.constant 0 : index
    %c0_4 = arith.constant 0 : index
    %3 = vector.load %arg4[%c0_3, %c0_4] : memref<1x512xf32, #tpu.memory_space<vmem>>, vector<1x512xf32>
    %4 = vector.broadcast %3 : vector<1x512xf32> to vector<64x512xf32>
    %5 = arith.addf %2, %4 : vector<64x512xf32>
    %c0_5 = arith.constant 0 : index
    %c0_6 = arith.constant 0 : index
    %6 = vector.load %arg6[%c0_5, %c0_6] : memref<64x512xf32, #tpu.memory_space<vmem>>, vector<64x512xf32>
    tpu.vector_store %arg6[%c0_5, %c0_6], %5 {strides = array<i32>} : memref<64x512xf32, #tpu.memory_space<vmem>>, vector<64x512xf32>,
    %c0_7 = arith.constant 0 : index
    %c0_8 = arith.constant 0 : index
    %7 = vector.load %arg3[%c0_7, %c0_8] : memref<128x512xbf16, #tpu.memory_space<vmem>>, vector<128x512xbf16>
    %cst_9 = arith.constant 0.000000e+00 : f32
    %8 = vector.broadcast %cst_9 : f32 to vector<8x128xf32>
    %cst_10 = arith.constant 0.000000e+00 : f32
    %9 = vector.broadcast %cst_10 : f32 to vector<8x128xf32>
    %c0_i32 = arith.constant 0 : i32
    %c8_i32 = arith.constant 8 : i32
    %10 = arith.muli %c0_i32, %c8_i32 : i32
    %11 = tpu.assume_multiple %10, 8 : i32
    %12 = arith.index_cast %11 : i32 to index
    %c0_11 = arith.constant 0 : index
    %13 = vector.load %arg6[%12, %c0_11] : memref<64x512xf32, #tpu.memory_space<vmem>>, vector<8x512xf32>
    %14 = arith.truncf %8 : vector<8x128xf32> to vector<8x128xbf16>
    %cst_12 = arith.constant dense<0.000000e+00> : vector<8x512xf32>
    %15 = tpu.matmul %14, %7, %cst_12 {dimension_numbers = #tpu.dot_dimension_numbers<[1], [0], [0], [1], [0, 0, 1, 1], [], []>} : vector<8x128xbf16>, vector<128x512xbf16>, vector<8x512xf32> -> vector<8x512xf32>
    %16 = arith.addf %13, %15 : vector<8x512xf32>
    %17 = vector.extract_strided_slice %16 {offsets = [0, 0], sizes = [8, 128], strides = [1, 1]} : vector<8x512xf32> to vector<8x128xf32>
    %18 = arith.negf %17 : vector<8x128xf32>
    %19 = math.exp %18 : vector<8x128xf32>
    %cst_13 = arith.constant 1.000000e+00 : f32
    %20 = vector.broadcast %cst_13 : f32 to vector<8x128xf32>
    %21 = arith.addf %20, %19 : vector<8x128xf32>
    %22 = arith.divf %20, %21 : vector<8x128xf32>
    %23 = vector.extract_strided_slice %16 {offsets = [0, 128], sizes = [8, 128], strides = [1, 1]} : vector<8x512xf32> to vector<8x128xf32>
    %24 = arith.negf %23 : vector<8x128xf32>
    %25 = math.exp %24 : vector<8x128xf32>
    %cst_14 = arith.constant 1.000000e+00 : f32
    %26 = vector.broadcast %cst_14 : f32 to vector<8x128xf32>
    %27 = arith.addf %26, %25 : vector<8x128xf32>
    %28 = arith.divf %26, %27 : vector<8x128xf32>
    %29 = vector.extract_strided_slice %16 {offsets = [0, 256], sizes = [8, 128], strides = [1, 1]} : vector<8x512xf32> to vector<8x128xf32>
    %30 = math.tanh %29 : vector<8x128xf32>
    %31 = vector.extract_strided_slice %16 {offsets = [0, 384], sizes = [8, 128], strides = [1, 1]} : vector<8x512xf32> to vector<8x128xf32>
    %32 = arith.negf %31 : vector<8x128xf32>
    %33 = math.exp %32 : vector<8x128xf32>
    %cst_15 = arith.constant 1.000000e+00 : f32
    %34 = vector.broadcast %cst_15 : f32 to vector<8x128xf32>
    %35 = arith.addf %34, %33 : vector<8x128xf32>
    %36 = arith.divf %34, %35 : vector<8x128xf32>
    %37 = arith.mulf %28, %9 : vector<8x128xf32>
    %38 = arith.mulf %22, %30 : vector<8x128xf32>
    %39 = arith.addf %37, %38 : vector<8x128xf32>
    %40 = math.tanh %39 : vector<8x128xf32>
    %41 = arith.mulf %36, %40 : vector<8x128xf32>
    %c1_i32 = arith.constant 1 : i32
    %c8_i32_16 = arith.constant 8 : i32
    %42 = arith.muli %c1_i32, %c8_i32_16 : i32
    %43 = tpu.assume_multiple %42, 8 : i32
    %44 = arith.index_cast %43 : i32 to index
    %c0_17 = arith.constant 0 : index
    %45 = vector.load %arg6[%44, %c0_17] : memref<64x512xf32, #tpu.memory_space<vmem>>, vector<8x512xf32>
    %46 = arith.truncf %41 : vector<8x128xf32> to vector<8x128xbf16>
    %cst_18 = arith.constant dense<0.000000e+00> : vector<8x512xf32>
    %47 = tpu.matmul %46, %7, %cst_18 {dimension_numbers = #tpu.dot_dimension_numbers<[1], [0], [0], [1], [0, 0, 1, 1], [], []>} : vector<8x128xbf16>, vector<128x512xbf16>, vector<8x512xf32> -> vector<8x512xf32>
    %48 = arith.addf %45, %47 : vector<8x512xf32>
    %49 = vector.extract_strided_slice %48 {offsets = [0, 0], sizes = [8, 128], strides = [1, 1]} : vector<8x512xf32> to vector<8x128xf32>
    %50 = arith.negf %49 : vector<8x128xf32>
    %51 = math.exp %50 : vector<8x128xf32>
    %cst_19 = arith.constant 1.000000e+00 : f32
    %52 = vector.broadcast %cst_19 : f32 to vector<8x128xf32>
    %53 = arith.addf %52, %51 : vector<8x128xf32>
    %54 = arith.divf %52, %53 : vector<8x128xf32>
    %55 = vector.extract_strided_slice %48 {offsets = [0, 128], sizes = [8, 128], strides = [1, 1]} : vector<8x512xf32> to vector<8x128xf32>
    %56 = arith.negf %55 : vector<8x128xf32>
    %57 = math.exp %56 : vector<8x128xf32>
    %cst_20 = arith.constant 1.000000e+00 : f32
    %58 = vector.broadcast %cst_20 : f32 to vector<8x128xf32>
    %59 = arith.addf %58, %57 : vector<8x128xf32>
    %60 = arith.divf %58, %59 : vector<8x128xf32>
    %61 = vector.extract_strided_slice %48 {offsets = [0, 256], sizes = [8, 128], strides = [1, 1]} : vector<8x512xf32> to vector<8x128xf32>
    %62 = math.tanh %61 : vector<8x128xf32>
    %63 = vector.extract_strided_slice %48 {offsets = [0, 384], sizes = [8, 128], strides = [1, 1]} : vector<8x512xf32> to vector<8x128xf32>
    %64 = arith.negf %63 : vector<8x128xf32>
    %65 = math.exp %64 : vector<8x128xf32>
    %cst_21 = arith.constant 1.000000e+00 : f32
    %66 = vector.broadcast %cst_21 : f32 to vector<8x128xf32>
    %67 = arith.addf %66, %65 : vector<8x128xf32>
    %68 = arith.divf %66, %67 : vector<8x128xf32>
    %69 = arith.mulf %60, %39 : vector<8x128xf32>
    %70 = arith.mulf %54, %62 : vector<8x128xf32>
    %71 = arith.addf %69, %70 : vector<8x128xf32>
    %72 = math.tanh %71 : vector<8x128xf32>
    %73 = arith.mulf %68, %72 : vector<8x128xf32>
    %c2_i32 = arith.constant 2 : i32
    %c8_i32_22 = arith.constant 8 : i32
    %74 = arith.muli %c2_i32, %c8_i32_22 : i32
    %75 = tpu.assume_multiple %74, 8 : i32
    %76 = arith.index_cast %75 : i32 to index
    %c0_23 = arith.constant 0 : index
    %77 = vector.load %arg6[%76, %c0_23] : memref<64x512xf32, #tpu.memory_space<vmem>>, vector<8x512xf32>
    %78 = arith.truncf %73 : vector<8x128xf32> to vector<8x128xbf16>
    %cst_24 = arith.constant dense<0.000000e+00> : vector<8x512xf32>
    %79 = tpu.matmul %78, %7, %cst_24 {dimension_numbers = #tpu.dot_dimension_numbers<[1], [0], [0], [1], [0, 0, 1, 1], [], []>} : vector<8x128xbf16>, vector<128x512xbf16>, vector<8x512xf32> -> vector<8x512xf32>
    %80 = arith.addf %77, %79 : vector<8x512xf32>
    %81 = vector.extract_strided_slice %80 {offsets = [0, 0], sizes = [8, 128], strides = [1, 1]} : vector<8x512xf32> to vector<8x128xf32>
    %82 = arith.negf %81 : vector<8x128xf32>
    %83 = math.exp %82 : vector<8x128xf32>
    %cst_25 = arith.constant 1.000000e+00 : f32
    %84 = vector.broadcast %cst_25 : f32 to vector<8x128xf32>
    %85 = arith.addf %84, %83 : vector<8x128xf32>
    %86 = arith.divf %84, %85 : vector<8x128xf32>
    %87 = vector.extract_strided_slice %80 {offsets = [0, 128], sizes = [8, 128], strides = [1, 1]} : vector<8x512xf32> to vector<8x128xf32>
    %88 = arith.negf %87 : vector<8x128xf32>
    %89 = math.exp %88 : vector<8x128xf32>
    %cst_26 = arith.constant 1.000000e+00 : f32
    %90 = vector.broadcast %cst_26 : f32 to vector<8x128xf32>
    %91 = arith.addf %90, %89 : vector<8x128xf32>
    %92 = arith.divf %90, %91 : vector<8x128xf32>
    %93 = vector.extract_strided_slice %80 {offsets = [0, 256], sizes = [8, 128], strides = [1, 1]} : vector<8x512xf32> to vector<8x128xf32>
    %94 = math.tanh %93 : vector<8x128xf32>
    %95 = vector.extract_strided_slice %80 {offsets = [0, 384], sizes = [8, 128], strides = [1, 1]} : vector<8x512xf32> to vector<8x128xf32>
    %96 = arith.negf %95 : vector<8x128xf32>
    %97 = math.exp %96 : vector<8x128xf32>
    %cst_27 = arith.constant 1.000000e+00 : f32
    %98 = vector.broadcast %cst_27 : f32 to vector<8x128xf32>
    %99 = arith.addf %98, %97 : vector<8x128xf32>
    %100 = arith.divf %98, %99 : vector<8x128xf32>
    %101 = arith.mulf %92, %71 : vector<8x128xf32>
    %102 = arith.mulf %86, %94 : vector<8x128xf32>
    %103 = arith.addf %101, %102 : vector<8x128xf32>
    %104 = math.tanh %103 : vector<8x128xf32>
    %105 = arith.mulf %100, %104 : vector<8x128xf32>
    %c3_i32 = arith.constant 3 : i32
    %c8_i32_28 = arith.constant 8 : i32
    %106 = arith.muli %c3_i32, %c8_i32_28 : i32
    %107 = tpu.assume_multiple %106, 8 : i32
    %108 = arith.index_cast %107 : i32 to index
    %c0_29 = arith.constant 0 : index
    %109 = vector.load %arg6[%108, %c0_29] : memref<64x512xf32, #tpu.memory_space<vmem>>, vector<8x512xf32>
    %110 = arith.truncf %105 : vector<8x128xf32> to vector<8x128xbf16>
    %cst_30 = arith.constant dense<0.000000e+00> : vector<8x512xf32>
    %111 = tpu.matmul %110, %7, %cst_30 {dimension_numbers = #tpu.dot_dimension_numbers<[1], [0], [0], [1], [0, 0, 1, 1], [], []>} : vector<8x128xbf16>, vector<128x512xbf16>, vector<8x512xf32> -> vector<8x512xf32>
    %112 = arith.addf %109, %111 : vector<8x512xf32>
    %113 = vector.extract_strided_slice %112 {offsets = [0, 0], sizes = [8, 128], strides = [1, 1]} : vector<8x512xf32> to vector<8x128xf32>
    %114 = arith.negf %113 : vector<8x128xf32>
    %115 = math.exp %114 : vector<8x128xf32>
    %cst_31 = arith.constant 1.000000e+00 : f32
    %116 = vector.broadcast %cst_31 : f32 to vector<8x128xf32>
    %117 = arith.addf %116, %115 : vector<8x128xf32>
    %118 = arith.divf %116, %117 : vector<8x128xf32>
    %119 = vector.extract_strided_slice %112 {offsets = [0, 128], sizes = [8, 128], strides = [1, 1]} : vector<8x512xf32> to vector<8x128xf32>
    %120 = arith.negf %119 : vector<8x128xf32>
    %121 = math.exp %120 : vector<8x128xf32>
    %cst_32 = arith.constant 1.000000e+00 : f32
    %122 = vector.broadcast %cst_32 : f32 to vector<8x128xf32>
    %123 = arith.addf %122, %121 : vector<8x128xf32>
    %124 = arith.divf %122, %123 : vector<8x128xf32>
    %125 = vector.extract_strided_slice %112 {offsets = [0, 256], sizes = [8, 128], strides = [1, 1]} : vector<8x512xf32> to vector<8x128xf32>
    %126 = math.tanh %125 : vector<8x128xf32>
    %127 = vector.extract_strided_slice %112 {offsets = [0, 384], sizes = [8, 128], strides = [1, 1]} : vector<8x512xf32> to vector<8x128xf32>
    %128 = arith.negf %127 : vector<8x128xf32>
    %129 = math.exp %128 : vector<8x128xf32>
    %cst_33 = arith.constant 1.000000e+00 : f32
    %130 = vector.broadcast %cst_33 : f32 to vector<8x128xf32>
    %131 = arith.addf %130, %129 : vector<8x128xf32>
    %132 = arith.divf %130, %131 : vector<8x128xf32>
    %133 = arith.mulf %124, %103 : vector<8x128xf32>
    %134 = arith.mulf %118, %126 : vector<8x128xf32>
    %135 = arith.addf %133, %134 : vector<8x128xf32>
    %136 = math.tanh %135 : vector<8x128xf32>
    %137 = arith.mulf %132, %136 : vector<8x128xf32>
    %c4_i32 = arith.constant 4 : i32
    %c8_i32_34 = arith.constant 8 : i32
    %138 = arith.muli %c4_i32, %c8_i32_34 : i32
    %139 = tpu.assume_multiple %138, 8 : i32
    %140 = arith.index_cast %139 : i32 to index
    %c0_35 = arith.constant 0 : index
    %141 = vector.load %arg6[%140, %c0_35] : memref<64x512xf32, #tpu.memory_space<vmem>>, vector<8x512xf32>
    %142 = arith.truncf %137 : vector<8x128xf32> to vector<8x128xbf16>
    %cst_36 = arith.constant dense<0.000000e+00> : vector<8x512xf32>
    %143 = tpu.matmul %142, %7, %cst_36 {dimension_numbers = #tpu.dot_dimension_numbers<[1], [0], [0], [1], [0, 0, 1, 1], [], []>} : vector<8x128xbf16>, vector<128x512xbf16>, vector<8x512xf32> -> vector<8x512xf32>
    %144 = arith.addf %141, %143 : vector<8x512xf32>
    %145 = vector.extract_strided_slice %144 {offsets = [0, 0], sizes = [8, 128], strides = [1, 1]} : vector<8x512xf32> to vector<8x128xf32>
    %146 = arith.negf %145 : vector<8x128xf32>
    %147 = math.exp %146 : vector<8x128xf32>
    %cst_37 = arith.constant 1.000000e+00 : f32
    %148 = vector.broadcast %cst_37 : f32 to vector<8x128xf32>
    %149 = arith.addf %148, %147 : vector<8x128xf32>
    %150 = arith.divf %148, %149 : vector<8x128xf32>
    %151 = vector.extract_strided_slice %144 {offsets = [0, 128], sizes = [8, 128], strides = [1, 1]} : vector<8x512xf32> to vector<8x128xf32>
    %152 = arith.negf %151 : vector<8x128xf32>
    %153 = math.exp %152 : vector<8x128xf32>
    %cst_38 = arith.constant 1.000000e+00 : f32
    %154 = vector.broadcast %cst_38 : f32 to vector<8x128xf32>
    %155 = arith.addf %154, %153 : vector<8x128xf32>
    %156 = arith.divf %154, %155 : vector<8x128xf32>
    %157 = vector.extract_strided_slice %144 {offsets = [0, 256], sizes = [8, 128], strides = [1, 1]} : vector<8x512xf32> to vector<8x128xf32>
    %158 = math.tanh %157 : vector<8x128xf32>
    %159 = vector.extract_strided_slice %144 {offsets = [0, 384], sizes = [8, 128], strides = [1, 1]} : vector<8x512xf32> to vector<8x128xf32>
    %160 = arith.negf %159 : vector<8x128xf32>
    %161 = math.exp %160 : vector<8x128xf32>
    %cst_39 = arith.constant 1.000000e+00 : f32
    %162 = vector.broadcast %cst_39 : f32 to vector<8x128xf32>
    %163 = arith.addf %162, %161 : vector<8x128xf32>
    %164 = arith.divf %162, %163 : vector<8x128xf32>
    %165 = arith.mulf %156, %135 : vector<8x128xf32>
    %166 = arith.mulf %150, %158 : vector<8x128xf32>
    %167 = arith.addf %165, %166 : vector<8x128xf32>
    %168 = math.tanh %167 : vector<8x128xf32>
    %169 = arith.mulf %164, %168 : vector<8x128xf32>
    %c5_i32 = arith.constant 5 : i32
    %c8_i32_40 = arith.constant 8 : i32
    %170 = arith.muli %c5_i32, %c8_i32_40 : i32
    %171 = tpu.assume_multiple %170, 8 : i32
    %172 = arith.index_cast %171 : i32 to index
    %c0_41 = arith.constant 0 : index
    %173 = vector.load %arg6[%172, %c0_41] : memref<64x512xf32, #tpu.memory_space<vmem>>, vector<8x512xf32>
    %174 = arith.truncf %169 : vector<8x128xf32> to vector<8x128xbf16>
    %cst_42 = arith.constant dense<0.000000e+00> : vector<8x512xf32>
    %175 = tpu.matmul %174, %7, %cst_42 {dimension_numbers = #tpu.dot_dimension_numbers<[1], [0], [0], [1], [0, 0, 1, 1], [], []>} : vector<8x128xbf16>, vector<128x512xbf16>, vector<8x512xf32> -> vector<8x512xf32>
    %176 = arith.addf %173, %175 : vector<8x512xf32>
    %177 = vector.extract_strided_slice %176 {offsets = [0, 0], sizes = [8, 128], strides = [1, 1]} : vector<8x512xf32> to vector<8x128xf32>
    %178 = arith.negf %177 : vector<8x128xf32>
    %179 = math.exp %178 : vector<8x128xf32>
    %cst_43 = arith.constant 1.000000e+00 : f32
    %180 = vector.broadcast %cst_43 : f32 to vector<8x128xf32>
    %181 = arith.addf %180, %179 : vector<8x128xf32>
    %182 = arith.divf %180, %181 : vector<8x128xf32>
    %183 = vector.extract_strided_slice %176 {offsets = [0, 128], sizes = [8, 128], strides = [1, 1]} : vector<8x512xf32> to vector<8x128xf32>
    %184 = arith.negf %183 : vector<8x128xf32>
    %185 = math.exp %184 : vector<8x128xf32>
    %cst_44 = arith.constant 1.000000e+00 : f32
    %186 = vector.broadcast %cst_44 : f32 to vector<8x128xf32>
    %187 = arith.addf %186, %185 : vector<8x128xf32>
    %188 = arith.divf %186, %187 : vector<8x128xf32>
    %189 = vector.extract_strided_slice %176 {offsets = [0, 256], sizes = [8, 128], strides = [1, 1]} : vector<8x512xf32> to vector<8x128xf32>
    %190 = math.tanh %189 : vector<8x128xf32>
    %191 = vector.extract_strided_slice %176 {offsets = [0, 384], sizes = [8, 128], strides = [1, 1]} : vector<8x512xf32> to vector<8x128xf32>
    %192 = arith.negf %191 : vector<8x128xf32>
    %193 = math.exp %192 : vector<8x128xf32>
    %cst_45 = arith.constant 1.000000e+00 : f32
    %194 = vector.broadcast %cst_45 : f32 to vector<8x128xf32>
    %195 = arith.addf %194, %193 : vector<8x128xf32>
    %196 = arith.divf %194, %195 : vector<8x128xf32>
    %197 = arith.mulf %188, %167 : vector<8x128xf32>
    %198 = arith.mulf %182, %190 : vector<8x128xf32>
    %199 = arith.addf %197, %198 : vector<8x128xf32>
    %200 = math.tanh %199 : vector<8x128xf32>
    %201 = arith.mulf %196, %200 : vector<8x128xf32>
    %c6_i32 = arith.constant 6 : i32
    %c8_i32_46 = arith.constant 8 : i32
    %202 = arith.muli %c6_i32, %c8_i32_46 : i32
    %203 = tpu.assume_multiple %202, 8 : i32
    %204 = arith.index_cast %203 : i32 to index
    %c0_47 = arith.constant 0 : index
    %205 = vector.load %arg6[%204, %c0_47] : memref<64x512xf32, #tpu.memory_space<vmem>>, vector<8x512xf32>
    %206 = arith.truncf %201 : vector<8x128xf32> to vector<8x128xbf16>
    %cst_48 = arith.constant dense<0.000000e+00> : vector<8x512xf32>
    %207 = tpu.matmul %206, %7, %cst_48 {dimension_numbers = #tpu.dot_dimension_numbers<[1], [0], [0], [1], [0, 0, 1, 1], [], []>} : vector<8x128xbf16>, vector<128x512xbf16>, vector<8x512xf32> -> vector<8x512xf32>
    %208 = arith.addf %205, %207 : vector<8x512xf32>
    %209 = vector.extract_strided_slice %208 {offsets = [0, 0], sizes = [8, 128], strides = [1, 1]} : vector<8x512xf32> to vector<8x128xf32>
    %210 = arith.negf %209 : vector<8x128xf32>
    %211 = math.exp %210 : vector<8x128xf32>
    %cst_49 = arith.constant 1.000000e+00 : f32
    %212 = vector.broadcast %cst_49 : f32 to vector<8x128xf32>
    %213 = arith.addf %212, %211 : vector<8x128xf32>
    %214 = arith.divf %212, %213 : vector<8x128xf32>
    %215 = vector.extract_strided_slice %208 {offsets = [0, 128], sizes = [8, 128], strides = [1, 1]} : vector<8x512xf32> to vector<8x128xf32>
    %216 = arith.negf %215 : vector<8x128xf32>
    %217 = math.exp %216 : vector<8x128xf32>
    %cst_50 = arith.constant 1.000000e+00 : f32
    %218 = vector.broadcast %cst_50 : f32 to vector<8x128xf32>
    %219 = arith.addf %218, %217 : vector<8x128xf32>
    %220 = arith.divf %218, %219 : vector<8x128xf32>
    %221 = vector.extract_strided_slice %208 {offsets = [0, 256], sizes = [8, 128], strides = [1, 1]} : vector<8x512xf32> to vector<8x128xf32>
    %222 = math.tanh %221 : vector<8x128xf32>
    %223 = vector.extract_strided_slice %208 {offsets = [0, 384], sizes = [8, 128], strides = [1, 1]} : vector<8x512xf32> to vector<8x128xf32>
    %224 = arith.negf %223 : vector<8x128xf32>
    %225 = math.exp %224 : vector<8x128xf32>
    %cst_51 = arith.constant 1.000000e+00 : f32
    %226 = vector.broadcast %cst_51 : f32 to vector<8x128xf32>
    %227 = arith.addf %226, %225 : vector<8x128xf32>
    %228 = arith.divf %226, %227 : vector<8x128xf32>
    %229 = arith.mulf %220, %199 : vector<8x128xf32>
    %230 = arith.mulf %214, %222 : vector<8x128xf32>
    %231 = arith.addf %229, %230 : vector<8x128xf32>
    %232 = math.tanh %231 : vector<8x128xf32>
    %233 = arith.mulf %228, %232 : vector<8x128xf32>
    %c7_i32 = arith.constant 7 : i32
    %c8_i32_52 = arith.constant 8 : i32
    %234 = arith.muli %c7_i32, %c8_i32_52 : i32
    %235 = tpu.assume_multiple %234, 8 : i32
    %236 = arith.index_cast %235 : i32 to index
    %c0_53 = arith.constant 0 : index
    %237 = vector.load %arg6[%236, %c0_53] : memref<64x512xf32, #tpu.memory_space<vmem>>, vector<8x512xf32>
    %238 = arith.truncf %233 : vector<8x128xf32> to vector<8x128xbf16>
    %cst_54 = arith.constant dense<0.000000e+00> : vector<8x512xf32>
    %239 = tpu.matmul %238, %7, %cst_54 {dimension_numbers = #tpu.dot_dimension_numbers<[1], [0], [0], [1], [0, 0, 1, 1], [], []>} : vector<8x128xbf16>, vector<128x512xbf16>, vector<8x512xf32> -> vector<8x512xf32>
    %240 = arith.addf %237, %239 : vector<8x512xf32>
    %241 = vector.extract_strided_slice %240 {offsets = [0, 0], sizes = [8, 128], strides = [1, 1]} : vector<8x512xf32> to vector<8x128xf32>
    %242 = arith.negf %241 : vector<8x128xf32>
    %243 = math.exp %242 : vector<8x128xf32>
    %cst_55 = arith.constant 1.000000e+00 : f32
    %244 = vector.broadcast %cst_55 : f32 to vector<8x128xf32>
    %245 = arith.addf %244, %243 : vector<8x128xf32>
    %246 = arith.divf %244, %245 : vector<8x128xf32>
    %247 = vector.extract_strided_slice %240 {offsets = [0, 128], sizes = [8, 128], strides = [1, 1]} : vector<8x512xf32> to vector<8x128xf32>
    %248 = arith.negf %247 : vector<8x128xf32>
    %249 = math.exp %248 : vector<8x128xf32>
    %cst_56 = arith.constant 1.000000e+00 : f32
    %250 = vector.broadcast %cst_56 : f32 to vector<8x128xf32>
    %251 = arith.addf %250, %249 : vector<8x128xf32>
    %252 = arith.divf %250, %251 : vector<8x128xf32>
    %253 = vector.extract_strided_slice %240 {offsets = [0, 256], sizes = [8, 128], strides = [1, 1]} : vector<8x512xf32> to vector<8x128xf32>
    %254 = math.tanh %253 : vector<8x128xf32>
    %255 = vector.extract_strided_slice %240 {offsets = [0, 384], sizes = [8, 128], strides = [1, 1]} : vector<8x512xf32> to vector<8x128xf32>
    %256 = arith.negf %255 : vector<8x128xf32>
    %257 = math.exp %256 : vector<8x128xf32>
    %cst_57 = arith.constant 1.000000e+00 : f32
    %258 = vector.broadcast %cst_57 : f32 to vector<8x128xf32>
    %259 = arith.addf %258, %257 : vector<8x128xf32>
    %260 = arith.divf %258, %259 : vector<8x128xf32>
    %261 = arith.mulf %252, %231 : vector<8x128xf32>
    %262 = arith.mulf %246, %254 : vector<8x128xf32>
    %263 = arith.addf %261, %262 : vector<8x128xf32>
    %264 = math.tanh %263 : vector<8x128xf32>
    %265 = arith.mulf %260, %264 : vector<8x128xf32>
    %c8_i32_58 = arith.constant 8 : i32
    %c0_59 = arith.constant 0 : index
    %c0_60 = arith.constant 0 : index
    %266 = vector.load %arg5[%c0_59, %c0_60] : memref<8x128xf32, #tpu.memory_space<vmem>>, vector<8x128xf32>
    tpu.vector_store %arg5[%c0_59, %c0_60], %265 {strides = array<i32>} : memref<8x128xf32, #tpu.memory_space<vmem>>, vector<8x128xf32>,
    return
  }
  func.func @transform_0(%arg0: i32) -> (i32, i32) {
    %c0_i32 = arith.constant 0 : i32
    %c0_i32_0 = arith.constant 0 : i32
    %c0_i32_1 = arith.constant 0 : i32
    return %c0_i32, %c0_i32_0 : i32, i32
  }
  func.func @transform_1(%arg0: i32) -> (i32, i32) {
    %c0_i32 = arith.constant 0 : i32
    %c0_i32_0 = arith.constant 0 : i32
    %c0_i32_1 = arith.constant 0 : i32
    return %c0_i32, %c0_i32_0 : i32, i32
  }
  func.func @transform_2(%arg0: i32) -> (i32, i32) {
    %c0_i32 = arith.constant 0 : i32
    %c0_i32_0 = arith.constant 0 : i32
    %c0_i32_1 = arith.constant 0 : i32
    return %c0_i32, %c0_i32_0 : i32, i32
  }
  func.func @transform_3(%arg0: i32) -> (i32, i32) {
    %c0_i32 = arith.constant 0 : i32
    %c0_i32_0 = arith.constant 0 : i32
    %c0_i32_1 = arith.constant 0 : i32
    return %c0_i32, %c0_i32_0 : i32, i32
  }
  func.func @transform_4(%arg0: i32) -> (i32, i32) {
    %c0_i32 = arith.constant 0 : i32
    %c0_i32_0 = arith.constant 0 : i32
    %c0_i32_1 = arith.constant 0 : i32
    return %c0_i32, %c0_i32_0 : i32, i32
  }
}

</mosaic_0001>

<llo_original>
// kernel: tpu_custom_call.1
$region0: #{tpu_custom_call.1}
  #allocation0 [shape = 'u32[]', space=smem, size = 0x4, offset = 0x4, fixed_abs, tag = 'smem constant byte address 0x4 - core index']
  #allocation1 [shape = 'u32[144,128]{1,0:T(1,128)}', space=vmem, size = 0x12000, scoped, tag = 'internal scratch']
  #allocation2 [shape = 'f32[64,512]{1,0:T(8,128)}', space=vmem, size = 0x20000, scoped, tag = 'scratch operand']
  %s0 = inlined_call_operand.hbm [shape: bf16[64,16], index: 0, kind: input, shape index: {}]
  %s1 = inlined_call_operand.hbm [shape: bf16[16,512], index: 1, kind: input, shape index: {}]
  %s2 = inlined_call_operand.hbm [shape: bf16[128,512], index: 2, kind: input, shape index: {}]
  %s3 = inlined_call_operand.hbm [shape: f32[1,512], index: 3, kind: input, shape index: {}]
  %s4 = inlined_call_operand.hbm [shape: f32[8,128], index: 4, kind: output, shape index: {}]
  %s5 = sld [smem:[#allocation0]]
  $region42: #{tpu_custom_call.1} parent=0
    _
  %s7 = ssub.s32 1, %s5
  %s8 = scalar_select 0, %s7, %s5
  $region1: #{tpu_custom_call.1} parent=0
    #allocation3 [shape = 'u8[16384]{0}', space=vmem, size = 0x4000, scoped, tag = 'input window, operand 0, single buffered']
    #allocation4 [shape = 's32[1]{0}', space=sflag, size = 0x4, scoped, tag = 'scoped memory for tpu_custom_call.1']
    #allocation5 [shape = 's32[1]{0}', space=sflag, size = 0x4, scoped, tag = 'scoped memory for tpu_custom_call.1']
    #allocation6 [shape = 'u8[16384]{0}', space=vmem, size = 0x4000, scoped, tag = 'input window, operand 1, single buffered']
    #allocation7 [shape = 's32[1]{0}', space=sflag, size = 0x4, scoped, tag = 'scoped memory for tpu_custom_call.1']
    #allocation8 [shape = 'u8[131072]{0}', space=vmem, size = 0x20000, scoped, tag = 'input window, operand 2, single buffered']
    #allocation9 [shape = 'u8[2048]{0}', space=vmem, size = 0x800, scoped, tag = 'input window, operand 3, single buffered']
    #allocation10 [shape = 's32[1]{0}', space=sflag, size = 0x4, scoped, tag = 'scoped memory for tpu_custom_call.1']
    #allocation11 [shape = 'u8[4096]{0}', space=vmem, size = 0x1000, scoped, tag = 'output window, operand 0, single buffered']
    %9 = vsyncpa [#allocation4], 0
    %10 = vsyncpa [#allocation7], 0
    %11 = vsyncpa [#allocation10], 0
    %12 = vsyncpa [#allocation5], 0
    // Predicated region
    $region2: #{tpu_custom_call.1} parent=1 // pred_check
      _
    $region3: #{tpu_custom_call.1} parent=1 // pred_check_branch
      %14 = sbr.rel (0) target = $region5
    $region4: #{tpu_custom_call.1} parent=1 // pred_region
      %s16 = ssub.s32 512, 512
      %17 = vsyncadd [#allocation4], %s16
      %s18 = sshll.u32 [#allocation3], 4
      %s19 = int_to_ptr.vmem [resolvable:$true] %s18
      %24 = dma.hbm_to_vmem [thread:$0]  %s0, 512, %s19, [#allocation4], 64, 64, 4
    $region5: #{tpu_custom_call.1} parent=1 // pred_fallthru
      _
    // Predicated region
    $region6: #{tpu_custom_call.1} parent=1 // pred_check
      _
    $region7: #{tpu_custom_call.1} parent=1 // pred_check_branch
      %26 = sbr.rel (0) target = $region9
    $region8: #{tpu_custom_call.1} parent=1 // pred_region
      %s28 = ssub.s32 512, 512
      %29 = vsyncadd [#allocation7], %s28
      %s30 = sshll.u32 [#allocation6], 4
      %s31 = int_to_ptr.vmem [resolvable:$true] %s30
      %36 = dma.hbm_to_vmem [thread:$0]  %s1, 512, %s31, [#allocation7], 256, 256, 16
    $region9: #{tpu_custom_call.1} parent=1 // pred_fallthru
      _
    // Predicated region
    $region10: #{tpu_custom_call.1} parent=1 // pred_check
      _
    $region11: #{tpu_custom_call.1} parent=1 // pred_check_branch
      %38 = sbr.rel (0) target = $region13
    $region12: #{tpu_custom_call.1} parent=1 // pred_region
      %s40 = ssub.s32 4096, 4096
      %41 = vsyncadd [#allocation7], %s40
      %s42 = sshll.u32 [#allocation8], 4
      %s43 = int_to_ptr.vmem [resolvable:$true] %s42
      %48 = dma.hbm_to_vmem [thread:$0]  %s2, 4096, %s43, [#allocation7], 256, 256, 16
    $region13: #{tpu_custom_call.1} parent=1 // pred_fallthru
      _
    // Predicated region
    $region14: #{tpu_custom_call.1} parent=1 // pred_check
      _
    $region15: #{tpu_custom_call.1} parent=1 // pred_check_branch
      %50 = sbr.rel (0) target = $region17
    $region16: #{tpu_custom_call.1} parent=1 // pred_region
      %s52 = ssub.s32 64, 64
      %53 = vsyncadd [#allocation10], %s52
      %s55 = sshll.u32 [#allocation9], 4
      %s56 = int_to_ptr.vmem [resolvable:$true] %s55
      %58 = dma.hbm_to_vmem [thread:$0]  %s3, 64, %s56, [#allocation10]
    $region17: #{tpu_custom_call.1} parent=1 // pred_fallthru
      _
    // Predicated region
    $region18: #{tpu_custom_call.1} parent=1 // pred_check
      _
    $region19: #{tpu_custom_call.1} parent=1 // pred_check_branch
      %60 = sbr.rel (0) target = $region21
    $region20: #{tpu_custom_call.1} parent=1 // pred_region
      %61 = dma.done [#allocation4], 512
    $region21: #{tpu_custom_call.1} parent=1 // pred_fallthru
      _
    // Predicated region
    $region22: #{tpu_custom_call.1} parent=1 // pred_check
      _
    $region23: #{tpu_custom_call.1} parent=1 // pred_check_branch
      %63 = sbr.rel (0) target = $region25
    $region24: #{tpu_custom_call.1} parent=1 // pred_region
      %64 = dma.done [#allocation7], 512
    $region25: #{tpu_custom_call.1} parent=1 // pred_fallthru
      _
    // Predicated region
    $region26: #{tpu_custom_call.1} parent=1 // pred_check
      _
    $region27: #{tpu_custom_call.1} parent=1 // pred_check_branch
      %66 = sbr.rel (0) target = $region29
    $region28: #{tpu_custom_call.1} parent=1 // pred_region
      %67 = dma.done [#allocation7], 4096
    $region29: #{tpu_custom_call.1} parent=1 // pred_fallthru
      _
    // Predicated region
    $region30: #{tpu_custom_call.1} parent=1 // pred_check
      _
    $region31: #{tpu_custom_call.1} parent=1 // pred_check_branch
      %69 = sbr.rel (0) target = $region33
    $region32: #{tpu_custom_call.1} parent=1 // pred_region
      %70 = dma.done [#allocation10], 64
    $region33: #{tpu_custom_call.1} parent=1 // pred_fallthru
      _
    %v72 = vld [vmem:[#allocation3] sm:$0xf]
    %v73 = vld [vmem:[#allocation3 + $0x4] sm:$0xf]
    %v74 = vld [vmem:[#allocation3 + $0x8] sm:$0xf]
    %v75 = vld [vmem:[#allocation3 + $0xc] sm:$0xf]
    %v76 = vld [vmem:[#allocation3 + $0x10] sm:$0xf]
    %v77 = vld [vmem:[#allocation3 + $0x14] sm:$0xf]
    %v78 = vld [vmem:[#allocation3 + $0x18] sm:$0xf]
    %v79 = vld [vmem:[#allocation3 + $0x1c] sm:$0xf]
    %v80 = vld [vmem:[#allocation6] sm:$0xff]
    %v81 = vld [vmem:[#allocation6 + $0x8] sm:$0xff]
    %v82 = vld [vmem:[#allocation6 + $0x10] sm:$0xff]
    %v83 = vld [vmem:[#allocation6 + $0x18] sm:$0xff]
    %v84 = vld [vmem:[#allocation9] sm:$0xf]
    %v86 = vlaneseq
    %v87 = vshrl.u32 %v86, 7
    %v88 = vsub.s32 0, %v87
    %v89 = vrot.slane %v84, %v88
    %v90 = vlaneseq
    %v91 = vshrl.u32 %v90, 7
    %v92 = vsub.s32 1, %v91
    %v93 = vrot.slane %v84, %v92
    %v94 = vlaneseq
    %v95 = vshrl.u32 %v94, 7
    %v96 = vsub.s32 2, %v95
    %v97 = vrot.slane %v84, %v96
    %v98 = vlaneseq
    %v99 = vshrl.u32 %v98, 7
    %v100 = vsub.s32 3, %v99
    %v101 = vrot.slane %v84, %v100
    %v114 = vunpack.c.l.b16 %v72
    %v115 = vunpack.c.l.b16 %v73
    %v116 = vunpack.c.l.b16 %v74
    %v117 = vunpack.c.l.b16 %v75
    %v118 = vunpack.c.l.b16 %v76
    %v119 = vunpack.c.l.b16 %v77
    %v120 = vunpack.c.l.b16 %v78
    %v121 = vunpack.c.l.b16 %v79
    %v122 = vpack.c.b16 %v115, %v114
    %v123 = vpack.c.b16 %v117, %v116
    %v124 = vpack.c.b16 %v119, %v118
    %v125 = vpack.c.b16 %v121, %v120
    %v130 = vunpack.c.l.b16 %v80
    %v131 = vunpack.c.h.b16 %v80
    %v132 = vunpack.c.l.b16 %v81
    %v133 = vunpack.c.h.b16 %v81
    %v134 = vunpack.c.l.b16 %v82
    %v135 = vunpack.c.h.b16 %v82
    %v136 = vunpack.c.l.b16 %v83
    %v137 = vunpack.c.h.b16 %v83
    %v138 = vpack.c.b16 %v134, %v130
    %v139 = vpack.c.b16 %v135, %v131
    %v140 = vpack.c.b16 %v136, %v132
    %v141 = vpack.c.b16 %v137, %v133
    %vm146 = vcmask 130048
    %v148 = vsel %vm146, %v122, 0
    %v151 = vsel %vm146, %v123, 0
    %v154 = vsel %vm146, %v124, 0
    %v157 = vsel %vm146, %v125, 0
    %159 = vmatprep.subr.bf16.mxu0 %v139
    %160 = vmatpush1.bf16.msra.mxu0 %v138
    %161 = vmatprep.subr.bf16.mxu0 0
    %162 = vmatpush1.bf16.msra.mxu0 0
    %163 = vmatprep.subr.bf16.mxu0 0
    %164 = vmatpush1.bf16.msra.mxu0 0
    %165 = vmatprep.subr.bf16.mxu0 0
    %166 = vmatpush1.bf16.msra.mxu0 0
    %167 = vmatprep.subr.bf16.mxu0 0
    %168 = vmatpush1.bf16.msra.mxu0 0
    %169 = vmatprep.subr.bf16.mxu0 0
    %170 = vmatpush1.bf16.msra.mxu0 0
    %171 = vmatprep.subr.bf16.mxu0 0
    %172 = vmatpush1.bf16.msra.mxu0 0
    %173 = vmatprep.subr.bf16.mxu0 0
    %174 = vmatpush1.bf16.msra.mxu0 0
    %175 = vmatprep.subr.bf16.mxu0 0
    %176 = vmatpush1.bf16.msra.mxu0 0
    %177 = vmatprep.subr.bf16.mxu0 0
    %178 = vmatpush1.bf16.msra.mxu0 0
    %179 = vmatprep.subr.bf16.mxu0 0
    %180 = vmatpush1.bf16.msra.mxu0 0
    %181 = vmatprep.subr.bf16.mxu0 0
    %182 = vmatpush1.bf16.msra.mxu0 0
    %183 = vmatprep.subr.bf16.mxu0 0
    %184 = vmatpush1.bf16.msra.mxu0 0
    %185 = vmatprep.subr.bf16.mxu0 0
    %186 = vmatpush1.bf16.msra.mxu0 0
    %187 = vmatprep.subr.bf16.mxu0 0
    %188 = vmatpush1.bf16.msra.mxu0 0
    %189 = vmatprep.subr.bf16.mxu0 0
    %190 = vmatpush1.bf16.msra.mxu0 0
    %191 = vmatprep.mubr.bf16.mxu0 0
    %192 = vmatmul.mubr.bf16.gmra.mrb[0].mxu0 %v148
    %v193 = vpop.f32.mrb[0].mxu0
    %v194 = vadd.f32 %v89, %v193
    %v195 = vpop.f32.mrb[0].mxu0
    %v196 = vadd.f32 %v93, %v195
    %v197 = vpop.f32.mrb[0].mxu0
    %v198 = vadd.f32 %v89, %v197
    %v199 = vpop.f32.mrb[0].mxu0
    %v200 = vadd.f32 %v93, %v199
    %201 = vmatprep.mubr.bf16.mxu0 0
    %202 = vmatmul.mubr.bf16.gmra.mrb[0].mxu0 %v151
    %v203 = vpop.f32.mrb[0].mxu0
    %v204 = vadd.f32 %v89, %v203
    %v205 = vpop.f32.mrb[0].mxu0
    %v206 = vadd.f32 %v93, %v205
    %v207 = vpop.f32.mrb[0].mxu0
    %v208 = vadd.f32 %v89, %v207
    %v209 = vpop.f32.mrb[0].mxu0
    %v210 = vadd.f32 %v93, %v209
    %211 = vmatprep.mubr.bf16.mxu0 0
    %212 = vmatmul.mubr.bf16.gmra.mrb[0].mxu0 %v154
    %v213 = vpop.f32.mrb[0].mxu0
    %v214 = vadd.f32 %v89, %v213
    %v215 = vpop.f32.mrb[0].mxu0
    %v216 = vadd.f32 %v93, %v215
    %v217 = vpop.f32.mrb[0].mxu0
    %v218 = vadd.f32 %v89, %v217
    %v219 = vpop.f32.mrb[0].mxu0
    %v220 = vadd.f32 %v93, %v219
    %221 = vmatprep.mubr.bf16.mxu0 0
    %222 = vmatmul.mubr.bf16.gmra.mrb[0].mxu0 %v157
    %v223 = vpop.f32.mrb[0].mxu0
    %v224 = vadd.f32 %v89, %v223
    %v225 = vpop.f32.mrb[0].mxu0
    %v226 = vadd.f32 %v93, %v225
    %v227 = vpop.f32.mrb[0].mxu0
    %v228 = vadd.f32 %v89, %v227
    %v229 = vpop.f32.mrb[0].mxu0
    %v230 = vadd.f32 %v93, %v229
    %231 = vdwg.mxu0
    %232 = vmatprep.subr.bf16.mxu0 %v141
    %233 = vmatpush1.bf16.msra.mxu0 %v140
    %234 = vmatprep.subr.bf16.mxu0 0
    %235 = vmatpush1.bf16.msra.mxu0 0
    %236 = vmatprep.subr.bf16.mxu0 0
    %237 = vmatpush1.bf16.msra.mxu0 0
    %238 = vmatprep.subr.bf16.mxu0 0
    %239 = vmatpush1.bf16.msra.mxu0 0
    %240 = vmatprep.subr.bf16.mxu0 0
    %241 = vmatpush1.bf16.msra.mxu0 0
    %242 = vmatprep.subr.bf16.mxu0 0
    %243 = vmatpush1.bf16.msra.mxu0 0
    %244 = vmatprep.subr.bf16.mxu0 0
    %245 = vmatpush1.bf16.msra.mxu0 0
    %246 = vmatprep.subr.bf16.mxu0 0
    %247 = vmatpush1.bf16.msra.mxu0 0
    %248 = vmatprep.subr.bf16.mxu0 0
    %249 = vmatpush1.bf16.msra.mxu0 0
    %250 = vmatprep.subr.bf16.mxu0 0
    %251 = vmatpush1.bf16.msra.mxu0 0
    %252 = vmatprep.subr.bf16.mxu0 0
    %253 = vmatpush1.bf16.msra.mxu0 0
    %254 = vmatprep.subr.bf16.mxu0 0
    %255 = vmatpush1.bf16.msra.mxu0 0
    %256 = vmatprep.subr.bf16.mxu0 0
    %257 = vmatpush1.bf16.msra.mxu0 0
    %258 = vmatprep.subr.bf16.mxu0 0
    %259 = vmatpush1.bf16.msra.mxu0 0
    %260 = vmatprep.subr.bf16.mxu0 0
    %261 = vmatpush1.bf16.msra.mxu0 0
    %262 = vmatprep.subr.bf16.mxu0 0
    %263 = vmatpush1.bf16.msra.mxu0 0
    %264 = vmatprep.mubr.bf16.mxu0 0
    %265 = vmatmul.mubr.bf16.gmra.mrb[0].mxu0 %v148
    %v266 = vpop.f32.mrb[0].mxu0
    %v267 = vadd.f32 %v97, %v266
    %v268 = vpop.f32.mrb[0].mxu0
    %v269 = vadd.f32 %v101, %v268
    %v270 = vpop.f32.mrb[0].mxu0
    %v271 = vadd.f32 %v97, %v270
    %v272 = vpop.f32.mrb[0].mxu0
    %v273 = vadd.f32 %v101, %v272
    %274 = vmatprep.mubr.bf16.mxu0 0
    %275 = vmatmul.mubr.bf16.gmra.mrb[0].mxu0 %v151
    %v276 = vpop.f32.mrb[0].mxu0
    %v277 = vadd.f32 %v97, %v276
    %v278 = vpop.f32.mrb[0].mxu0
    %v279 = vadd.f32 %v101, %v278
    %v280 = vpop.f32.mrb[0].mxu0
    %v281 = vadd.f32 %v97, %v280
    %v282 = vpop.f32.mrb[0].mxu0
    %v283 = vadd.f32 %v101, %v282
    %284 = vmatprep.mubr.bf16.mxu0 0
    %285 = vmatmul.mubr.bf16.gmra.mrb[0].mxu0 %v154
    %v286 = vpop.f32.mrb[0].mxu0
    %v287 = vadd.f32 %v97, %v286
    %v288 = vpop.f32.mrb[0].mxu0
    %v289 = vadd.f32 %v101, %v288
    %v290 = vpop.f32.mrb[0].mxu0
    %v291 = vadd.f32 %v97, %v290
    %v292 = vpop.f32.mrb[0].mxu0
    %v293 = vadd.f32 %v101, %v292
    %294 = vmatprep.mubr.bf16.mxu0 0
    %295 = vmatmul.mubr.bf16.gmra.mrb[0].mxu0 %v157
    %v296 = vpop.f32.mrb[0].mxu0
    %v297 = vadd.f32 %v97, %v296
    %v298 = vpop.f32.mrb[0].mxu0
    %v299 = vadd.f32 %v101, %v298
    %v300 = vpop.f32.mrb[0].mxu0
    %v301 = vadd.f32 %v97, %v300
    %v302 = vpop.f32.mrb[0].mxu0
    %v303 = vadd.f32 %v101, %v302
    %304 = vdwg.mxu0
    %305 = vst [vmem:[#allocation2] sm:$0xff] %v194
    %306 = vst [vmem:[#allocation2 + $0x8] sm:$0xff] %v196
    %307 = vst [vmem:[#allocation2 + $0x10] sm:$0xff] %v267
    %308 = vst [vmem:[#allocation2 + $0x18] sm:$0xff] %v269
    %309 = vst [vmem:[#allocation2 + $0x20] sm:$0xff] %v198
    %310 = vst [vmem:[#allocation2 + $0x28] sm:$0xff] %v200
    %311 = vst [vmem:[#allocation2 + $0x30] sm:$0xff] %v271
    %312 = vst [vmem:[#allocation2 + $0x38] sm:$0xff] %v273
    %313 = vst [vmem:[#allocation2 + $0x40] sm:$0xff] %v204
    %314 = vst [vmem:[#allocation2 + $0x48] sm:$0xff] %v206
    %315 = vst [vmem:[#allocation2 + $0x50] sm:$0xff] %v277
    %316 = vst [vmem:[#allocation2 + $0x58] sm:$0xff] %v279
    %317 = vst [vmem:[#allocation2 + $0x60] sm:$0xff] %v208
    %318 = vst [vmem:[#allocation2 + $0x68] sm:$0xff] %v210
    %319 = vst [vmem:[#allocation2 + $0x70] sm:$0xff] %v281
    %320 = vst [vmem:[#allocation2 + $0x78] sm:$0xff] %v283
    %321 = vst [vmem:[#allocation2 + $0x80] sm:$0xff] %v214
    %322 = vst [vmem:[#allocation2 + $0x88] sm:$0xff] %v216
    %323 = vst [vmem:[#allocation2 + $0x90] sm:$0xff] %v287
    %324 = vst [vmem:[#allocation2 + $0x98] sm:$0xff] %v289
    %325 = vst [vmem:[#allocation2 + $0xa0] sm:$0xff] %v218
    %326 = vst [vmem:[#allocation2 + $0xa8] sm:$0xff] %v220
    %327 = vst [vmem:[#allocation2 + $0xb0] sm:$0xff] %v291
    %328 = vst [vmem:[#allocation2 + $0xb8] sm:$0xff] %v293
    %329 = vst [vmem:[#allocation2 + $0xc0] sm:$0xff] %v224
    %330 = vst [vmem:[#allocation2 + $0xc8] sm:$0xff] %v226
    %331 = vst [vmem:[#allocation2 + $0xd0] sm:$0xff] %v297
    %332 = vst [vmem:[#allocation2 + $0xd8] sm:$0xff] %v299
    %333 = vst [vmem:[#allocation2 + $0xe0] sm:$0xff] %v228
    %334 = vst [vmem:[#allocation2 + $0xe8] sm:$0xff] %v230
    %335 = vst [vmem:[#allocation2 + $0xf0] sm:$0xff] %v301
    %336 = vst [vmem:[#allocation2 + $0xf8] sm:$0xff] %v303
    %v337 = vld [vmem:[#allocation8] sm:$0xff]
    %v338 = vld [vmem:[#allocation8 + $0x8] sm:$0xff]
    %v339 = vld [vmem:[#allocation8 + $0x10] sm:$0xff]
    %v340 = vld [vmem:[#allocation8 + $0x18] sm:$0xff]
    %v341 = vld [vmem:[#allocation8 + $0x20] sm:$0xff]
    %v342 = vld [vmem:[#allocation8 + $0x28] sm:$0xff]
    %v343 = vld [vmem:[#allocation8 + $0x30] sm:$0xff]
    %v344 = vld [vmem:[#allocation8 + $0x38] sm:$0xff]
    %v345 = vld [vmem:[#allocation8 + $0x40] sm:$0xff]
    %v346 = vld [vmem:[#allocation8 + $0x48] sm:$0xff]
    %v347 = vld [vmem:[#allocation8 + $0x50] sm:$0xff]
    %v348 = vld [vmem:[#allocation8 + $0x58] sm:$0xff]
    %v349 = vld [vmem:[#allocation8 + $0x60] sm:$0xff]
    %v350 = vld [vmem:[#allocation8 + $0x68] sm:$0xff]
    %v351 = vld [vmem:[#allocation8 + $0x70] sm:$0xff]
    %v352 = vld [vmem:[#allocation8 + $0x78] sm:$0xff]
    %v353 = vld [vmem:[#allocation8 + $0x80] sm:$0xff]
    %v354 = vld [vmem:[#allocation8 + $0x88] sm:$0xff]
    %v355 = vld [vmem:[#allocation8 + $0x90] sm:$0xff]
    %v356 = vld [vmem:[#allocation8 + $0x98] sm:$0xff]
    %v357 = vld [vmem:[#allocation8 + $0xa0] sm:$0xff]
    %v358 = vld [vmem:[#allocation8 + $0xa8] sm:$0xff]
    %v359 = vld [vmem:[#allocation8 + $0xb0] sm:$0xff]
    %v360 = vld [vmem:[#allocation8 + $0xb8] sm:$0xff]
    %v361 = vld [vmem:[#allocation8 + $0xc0] sm:$0xff]
    %v362 = vld [vmem:[#allocation8 + $0xc8] sm:$0xff]
    %v363 = vld [vmem:[#allocation8 + $0xd0] sm:$0xff]
    %v364 = vld [vmem:[#allocation8 + $0xd8] sm:$0xff]
    %v365 = vld [vmem:[#allocation8 + $0xe0] sm:$0xff]
    %v366 = vld [vmem:[#allocation8 + $0xe8] sm:$0xff]
    %v367 = vld [vmem:[#allocation8 + $0xf0] sm:$0xff]
    %v368 = vld [vmem:[#allocation8 + $0xf8] sm:$0xff]
    %s369 = smul.u32 0, 4
    %s370 = smul.addr %s369, 8
    %s371 = scalar_lea.vmem [#allocation2], %s370
    %v372 = vld [vmem:[%s371] sm:$0xff]
    %v373 = vld [vmem:[%s371 + $0x8] sm:$0xff]
    %v374 = vld [vmem:[%s371 + $0x10] sm:$0xff]
    %v375 = vld [vmem:[%s371 + $0x18] sm:$0xff]
    %v408 = vunpack.c.l.b16 %v337
    %v409 = vunpack.c.h.b16 %v337
    %v410 = vunpack.c.l.b16 %v338
    %v411 = vunpack.c.h.b16 %v338
    %v412 = vunpack.c.l.b16 %v339
    %v413 = vunpack.c.h.b16 %v339
    %v414 = vunpack.c.l.b16 %v340
    %v415 = vunpack.c.h.b16 %v340
    %v416 = vunpack.c.l.b16 %v341
    %v417 = vunpack.c.h.b16 %v341
    %v418 = vunpack.c.l.b16 %v342
    %v419 = vunpack.c.h.b16 %v342
    %v420 = vunpack.c.l.b16 %v343
    %v421 = vunpack.c.h.b16 %v343
    %v422 = vunpack.c.l.b16 %v344
    %v423 = vunpack.c.h.b16 %v344
    %v424 = vunpack.c.l.b16 %v345
    %v425 = vunpack.c.h.b16 %v345
    %v426 = vunpack.c.l.b16 %v346
    %v427 = vunpack.c.h.b16 %v346
    %v428 = vunpack.c.l.b16 %v347
    %v429 = vunpack.c.h.b16 %v347
    %v430 = vunpack.c.l.b16 %v348
    %v431 = vunpack.c.h.b16 %v348
    %v432 = vunpack.c.l.b16 %v349
    %v433 = vunpack.c.h.b16 %v349
    %v434 = vunpack.c.l.b16 %v350
    %v435 = vunpack.c.h.b16 %v350
    %v436 = vunpack.c.l.b16 %v351
    %v437 = vunpack.c.h.b16 %v351
    %v438 = vunpack.c.l.b16 %v352
    %v439 = vunpack.c.h.b16 %v352
    %v440 = vunpack.c.l.b16 %v353
    %v441 = vunpack.c.h.b16 %v353
    %v442 = vunpack.c.l.b16 %v354
    %v443 = vunpack.c.h.b16 %v354
    %v444 = vunpack.c.l.b16 %v355
    %v445 = vunpack.c.h.b16 %v355
    %v446 = vunpack.c.l.b16 %v356
    %v447 = vunpack.c.h.b16 %v356
    %v448 = vunpack.c.l.b16 %v357
    %v449 = vunpack.c.h.b16 %v357
    %v450 = vunpack.c.l.b16 %v358
    %v451 = vunpack.c.h.b16 %v358
    %v452 = vunpack.c.l.b16 %v359
    %v453 = vunpack.c.h.b16 %v359
    %v454 = vunpack.c.l.b16 %v360
    %v455 = vunpack.c.h.b16 %v360
    %v456 = vunpack.c.l.b16 %v361
    %v457 = vunpack.c.h.b16 %v361
    %v458 = vunpack.c.l.b16 %v362
    %v459 = vunpack.c.h.b16 %v362
    %v460 = vunpack.c.l.b16 %v363
    %v461 = vunpack.c.h.b16 %v363
    %v462 = vunpack.c.l.b16 %v364
    %v463 = vunpack.c.h.b16 %v364
    %v464 = vunpack.c.l.b16 %v365
    %v465 = vunpack.c.h.b16 %v365
    %v466 = vunpack.c.l.b16 %v366
    %v467 = vunpack.c.h.b16 %v366
    %v468 = vunpack.c.l.b16 %v367
    %v469 = vunpack.c.h.b16 %v367
    %v470 = vunpack.c.l.b16 %v368
    %v471 = vunpack.c.h.b16 %v368
    %v472 = vpack.c.b16 %v412, %v408
    %v473 = vpack.c.b16 %v413, %v409
    %v474 = vpack.c.b16 %v414, %v410
    %v475 = vpack.c.b16 %v415, %v411
    %v476 = vpack.c.b16 %v420, %v416
    %v477 = vpack.c.b16 %v421, %v417
    %v478 = vpack.c.b16 %v422, %v418
    %v479 = vpack.c.b16 %v423, %v419
    %v480 = vpack.c.b16 %v428, %v424
    %v481 = vpack.c.b16 %v429, %v425
    %v482 = vpack.c.b16 %v430, %v426
    %v483 = vpack.c.b16 %v431, %v427
    %v484 = vpack.c.b16 %v436, %v432
    %v485 = vpack.c.b16 %v437, %v433
    %v486 = vpack.c.b16 %v438, %v434
    %v487 = vpack.c.b16 %v439, %v435
    %v488 = vpack.c.b16 %v444, %v440
    %v489 = vpack.c.b16 %v445, %v441
    %v490 = vpack.c.b16 %v446, %v442
    %v491 = vpack.c.b16 %v447, %v443
    %v492 = vpack.c.b16 %v452, %v448
    %v493 = vpack.c.b16 %v453, %v449
    %v494 = vpack.c.b16 %v454, %v450
    %v495 = vpack.c.b16 %v455, %v451
    %v496 = vpack.c.b16 %v460, %v456
    %v497 = vpack.c.b16 %v461, %v457
    %v498 = vpack.c.b16 %v462, %v458
    %v499 = vpack.c.b16 %v463, %v459
    %v500 = vpack.c.b16 %v468, %v464
    %v501 = vpack.c.b16 %v469, %v465
    %v502 = vpack.c.b16 %v470, %v466
    %v503 = vpack.c.b16 %v471, %v467
    %536 = vmatprep.subr.bf16.mxu0 %v473
    %537 = vmatpush1.bf16.msra.mxu0 %v472
    %538 = vmatprep.subr.bf16.mxu0 %v477
    %539 = vmatpush1.bf16.msra.mxu0 %v476
    %540 = vmatprep.subr.bf16.mxu0 %v481
    %541 = vmatpush1.bf16.msra.mxu0 %v480
    %542 = vmatprep.subr.bf16.mxu0 %v485
    %543 = vmatpush1.bf16.msra.mxu0 %v484
    %544 = vmatprep.subr.bf16.mxu0 %v489
    %545 = vmatpush1.bf16.msra.mxu0 %v488
    %546 = vmatprep.subr.bf16.mxu0 %v493
    %547 = vmatpush1.bf16.msra.mxu0 %v492
    %548 = vmatprep.subr.bf16.mxu0 %v497
    %549 = vmatpush1.bf16.msra.mxu0 %v496
    %550 = vmatprep.subr.bf16.mxu0 %v501
    %551 = vmatpush1.bf16.msra.mxu0 %v500
    %552 = vmatprep.subr.bf16.mxu0 0
    %553 = vmatpush1.bf16.msra.mxu0 0
    %554 = vmatprep.subr.bf16.mxu0 0
    %555 = vmatpush1.bf16.msra.mxu0 0
    %556 = vmatprep.subr.bf16.mxu0 0
    %557 = vmatpush1.bf16.msra.mxu0 0
    %558 = vmatprep.subr.bf16.mxu0 0
    %559 = vmatpush1.bf16.msra.mxu0 0
    %560 = vmatprep.subr.bf16.mxu0 0
    %561 = vmatpush1.bf16.msra.mxu0 0
    %562 = vmatprep.subr.bf16.mxu0 0
    %563 = vmatpush1.bf16.msra.mxu0 0
    %564 = vmatprep.subr.bf16.mxu0 0
    %565 = vmatpush1.bf16.msra.mxu0 0
    %566 = vmatprep.subr.bf16.mxu0 0
    %567 = vmatpush1.bf16.msra.mxu0 0
    %568 = vmatprep.mubr.bf16.mxu0 0
    %569 = vmatmul.mubr.bf16.gmra.mrb[0].mxu0 0
    %v570 = vpop.f32.mrb[0].mxu0
    %v571 = vadd.f32 0.0, %v570
    %v572 = vpop.f32.mrb[0].mxu0
    %v573 = vadd.f32 0.0, %v572
    %v574 = vpop.f32.mrb[0].mxu0
    %v575 = vpop.f32.mrb[0].mxu0
    %576 = vdwg.mxu0
    %577 = vmatprep.subr.bf16.mxu0 %v475
    %578 = vmatpush1.bf16.msra.mxu0 %v474
    %579 = vmatprep.subr.bf16.mxu0 %v479
    %580 = vmatpush1.bf16.msra.mxu0 %v478
    %581 = vmatprep.subr.bf16.mxu0 %v483
    %582 = vmatpush1.bf16.msra.mxu0 %v482
    %583 = vmatprep.subr.bf16.mxu0 %v487
    %584 = vmatpush1.bf16.msra.mxu0 %v486
    %585 = vmatprep.subr.bf16.mxu0 %v491
    %586 = vmatpush1.bf16.msra.mxu0 %v490
    %587 = vmatprep.subr.bf16.mxu0 %v495
    %588 = vmatpush1.bf16.msra.mxu0 %v494
    %589 = vmatprep.subr.bf16.mxu0 %v499
    %590 = vmatpush1.bf16.msra.mxu0 %v498
    %591 = vmatprep.subr.bf16.mxu0 %v503
    %592 = vmatpush1.bf16.msra.mxu0 %v502
    %593 = vmatprep.subr.bf16.mxu0 0
    %594 = vmatpush1.bf16.msra.mxu0 0
    %595 = vmatprep.subr.bf16.mxu0 0
    %596 = vmatpush1.bf16.msra.mxu0 0
    %597 = vmatprep.subr.bf16.mxu0 0
    %598 = vmatpush1.bf16.msra.mxu0 0
    %599 = vmatprep.subr.bf16.mxu0 0
    %600 = vmatpush1.bf16.msra.mxu0 0
    %601 = vmatprep.subr.bf16.mxu0 0
    %602 = vmatpush1.bf16.msra.mxu0 0
    %603 = vmatprep.subr.bf16.mxu0 0
    %604 = vmatpush1.bf16.msra.mxu0 0
    %605 = vmatprep.subr.bf16.mxu0 0
    %606 = vmatpush1.bf16.msra.mxu0 0
    %607 = vmatprep.subr.bf16.mxu0 0
    %608 = vmatpush1.bf16.msra.mxu0 0
    %609 = vmatprep.mubr.bf16.mxu0 0
    %610 = vmatmul.mubr.bf16.gmra.mrb[0].mxu0 0
    %v611 = vpop.f32.mrb[0].mxu0
    %v612 = vadd.f32 0.0, %v611
    %v613 = vpop.f32.mrb[0].mxu0
    %v614 = vadd.f32 0.0, %v613
    %v615 = vpop.f32.mrb[0].mxu0
    %v616 = vpop.f32.mrb[0].mxu0
    %617 = vdwg.mxu0
    %v618 = vadd.f32 %v372, %v571
    %v619 = vadd.f32 %v373, %v573
    %v620 = vadd.f32 %v374, %v612
    %v621 = vadd.f32 %v375, %v614
    %v622 = vxor.u32 %v618, 2147483648
    %v623 = vmul.f32 %v622, 1.442695
    %v624 = vpow.pop %v623
    %v625 = vadd.f32 %v624, 1.0
    %v626 = vrcp.pop %v625
    %v627 = vmul.f32 1.0, %v626
    %v628 = vxor.u32 %v619, 2147483648
    %v629 = vmul.f32 %v628, 1.442695
    %v630 = vpow.pop %v629
    %v631 = vadd.f32 %v630, 1.0
    %v632 = vrcp.pop %v631
    %v633 = vmul.f32 1.0, %v632
    %v634 = vtanh.pop %v620
    %v635 = vxor.u32 %v621, 2147483648
    %v636 = vmul.f32 %v635, 1.442695
    %v637 = vpow.pop %v636
    %v638 = vadd.f32 %v637, 1.0
    %v639 = vrcp.pop %v638
    %v640 = vmul.f32 1.0, %v639
    %v641 = vmul.f32 %v633, 0.0
    %v642 = vmul.f32 %v627, %v634
    %v643 = vadd.f32 %v641, %v642
    %v644 = vtanh.pop %v643
    %v645 = vmul.f32 %v640, %v644
    %s646 = smul.u32 1, 4
    %s647 = smul.addr %s646, 8
    %s648 = scalar_lea.vmem [#allocation2], %s647
    %v649 = vld [vmem:[%s648] sm:$0xff]
    %v650 = vld [vmem:[%s648 + $0x8] sm:$0xff]
    %v651 = vld [vmem:[%s648 + $0x10] sm:$0xff]
    %v652 = vld [vmem:[%s648 + $0x18] sm:$0xff]
    %v653 = vpack.c.bf16 %v645, %v645
    %654 = vmatprep.subr.bf16.mxu0 %v473
    %655 = vmatpush1.bf16.msra.mxu0 %v472
    %656 = vmatprep.subr.bf16.mxu0 %v477
    %657 = vmatpush1.bf16.msra.mxu0 %v476
    %658 = vmatprep.subr.bf16.mxu0 %v481
    %659 = vmatpush1.bf16.msra.mxu0 %v480
    %660 = vmatprep.subr.bf16.mxu0 %v485
    %661 = vmatpush1.bf16.msra.mxu0 %v484
    %662 = vmatprep.subr.bf16.mxu0 %v489
    %663 = vmatpush1.bf16.msra.mxu0 %v488
    %664 = vmatprep.subr.bf16.mxu0 %v493
    %665 = vmatpush1.bf16.msra.mxu0 %v492
    %666 = vmatprep.subr.bf16.mxu0 %v497
    %667 = vmatpush1.bf16.msra.mxu0 %v496
    %668 = vmatprep.subr.bf16.mxu0 %v501
    %669 = vmatpush1.bf16.msra.mxu0 %v500
    %670 = vmatprep.subr.bf16.mxu0 0
    %671 = vmatpush1.bf16.msra.mxu0 0
    %672 = vmatprep.subr.bf16.mxu0 0
    %673 = vmatpush1.bf16.msra.mxu0 0
    %674 = vmatprep.subr.bf16.mxu0 0
    %675 = vmatpush1.bf16.msra.mxu0 0
    %676 = vmatprep.subr.bf16.mxu0 0
    %677 = vmatpush1.bf16.msra.mxu0 0
    %678 = vmatprep.subr.bf16.mxu0 0
    %679 = vmatpush1.bf16.msra.mxu0 0
    %680 = vmatprep.subr.bf16.mxu0 0
    %681 = vmatpush1.bf16.msra.mxu0 0
    %682 = vmatprep.subr.bf16.mxu0 0
    %683 = vmatpush1.bf16.msra.mxu0 0
    %684 = vmatprep.subr.bf16.mxu0 0
    %685 = vmatpush1.bf16.msra.mxu0 0
    %686 = vmatprep.mubr.bf16.mxu0 0
    %687 = vmatmul.mubr.bf16.gmra.mrb[0].mxu0 %v653
    %v688 = vpop.f32.mrb[0].mxu0
    %v689 = vadd.f32 0.0, %v688
    %v690 = vpop.f32.mrb[0].mxu0
    %v691 = vadd.f32 0.0, %v690
    %v692 = vpop.f32.mrb[0].mxu0
    %v693 = vpop.f32.mrb[0].mxu0
    %694 = vdwg.mxu0
    %695 = vmatprep.subr.bf16.mxu0 %v475
    %696 = vmatpush1.bf16.msra.mxu0 %v474
    %697 = vmatprep.subr.bf16.mxu0 %v479
    %698 = vmatpush1.bf16.msra.mxu0 %v478
    %699 = vmatprep.subr.bf16.mxu0 %v483
    %700 = vmatpush1.bf16.msra.mxu0 %v482
    %701 = vmatprep.subr.bf16.mxu0 %v487
    %702 = vmatpush1.bf16.msra.mxu0 %v486
    %703 = vmatprep.subr.bf16.mxu0 %v491
    %704 = vmatpush1.bf16.msra.mxu0 %v490
    %705 = vmatprep.subr.bf16.mxu0 %v495
    %706 = vmatpush1.bf16.msra.mxu0 %v494
    %707 = vmatprep.subr.bf16.mxu0 %v499
    %708 = vmatpush1.bf16.msra.mxu0 %v498
    %709 = vmatprep.subr.bf16.mxu0 %v503
    %710 = vmatpush1.bf16.msra.mxu0 %v502
    %711 = vmatprep.subr.bf16.mxu0 0
    %712 = vmatpush1.bf16.msra.mxu0 0
    %713 = vmatprep.subr.bf16.mxu0 0
    %714 = vmatpush1.bf16.msra.mxu0 0
    %715 = vmatprep.subr.bf16.mxu0 0
    %716 = vmatpush1.bf16.msra.mxu0 0
    %717 = vmatprep.subr.bf16.mxu0 0
    %718 = vmatpush1.bf16.msra.mxu0 0
    %719 = vmatprep.subr.bf16.mxu0 0
    %720 = vmatpush1.bf16.msra.mxu0 0
    %721 = vmatprep.subr.bf16.mxu0 0
    %722 = vmatpush1.bf16.msra.mxu0 0
    %723 = vmatprep.subr.bf16.mxu0 0
    %724 = vmatpush1.bf16.msra.mxu0 0
    %725 = vmatprep.subr.bf16.mxu0 0
    %726 = vmatpush1.bf16.msra.mxu0 0
    %727 = vmatprep.mubr.bf16.mxu0 0
    %728 = vmatmul.mubr.bf16.gmra.mrb[0].mxu0 %v653
    %v729 = vpop.f32.mrb[0].mxu0
    %v730 = vadd.f32 0.0, %v729
    %v731 = vpop.f32.mrb[0].mxu0
    %v732 = vadd.f32 0.0, %v731
    %v733 = vpop.f32.mrb[0].mxu0
    %v734 = vpop.f32.mrb[0].mxu0
    %735 = vdwg.mxu0
    %v736 = vadd.f32 %v649, %v689
    %v737 = vadd.f32 %v650, %v691
    %v738 = vadd.f32 %v651, %v730
    %v739 = vadd.f32 %v652, %v732
    %v740 = vxor.u32 %v736, 2147483648
    %v741 = vmul.f32 %v740, 1.442695
    %v742 = vpow.pop %v741
    %v743 = vadd.f32 %v742, 1.0
    %v744 = vrcp.pop %v743
    %v745 = vmul.f32 1.0, %v744
    %v746 = vxor.u32 %v737, 2147483648
    %v747 = vmul.f32 %v746, 1.442695
    %v748 = vpow.pop %v747
    %v749 = vadd.f32 %v748, 1.0
    %v750 = vrcp.pop %v749
    %v751 = vmul.f32 1.0, %v750
    %v752 = vtanh.pop %v738
    %v753 = vxor.u32 %v739, 2147483648
    %v754 = vmul.f32 %v753, 1.442695
    %v755 = vpow.pop %v754
    %v756 = vadd.f32 %v755, 1.0
    %v757 = vrcp.pop %v756
    %v758 = vmul.f32 1.0, %v757
    %v759 = vmul.f32 %v751, %v643
    %v760 = vmul.f32 %v745, %v752
    %v761 = vadd.f32 %v759, %v760
    %v762 = vtanh.pop %v761
    %v763 = vmul.f32 %v758, %v762
    %s764 = smul.u32 2, 4
    %s765 = smul.addr %s764, 8
    %s766 = scalar_lea.vmem [#allocation2], %s765
    %v767 = vld [vmem:[%s766] sm:$0xff]
    %v768 = vld [vmem:[%s766 + $0x8] sm:$0xff]
    %v769 = vld [vmem:[%s766 + $0x10] sm:$0xff]
    %v770 = vld [vmem:[%s766 + $0x18] sm:$0xff]
    %v771 = vpack.c.bf16 %v763, %v763
    %772 = vmatprep.subr.bf16.mxu0 %v473
    %773 = vmatpush1.bf16.msra.mxu0 %v472
    %774 = vmatprep.subr.bf16.mxu0 %v477
    %775 = vmatpush1.bf16.msra.mxu0 %v476
    %776 = vmatprep.subr.bf16.mxu0 %v481
    %777 = vmatpush1.bf16.msra.mxu0 %v480
    %778 = vmatprep.subr.bf16.mxu0 %v485
    %779 = vmatpush1.bf16.msra.mxu0 %v484
    %780 = vmatprep.subr.bf16.mxu0 %v489
    %781 = vmatpush1.bf16.msra.mxu0 %v488
    %782 = vmatprep.subr.bf16.mxu0 %v493
    %783 = vmatpush1.bf16.msra.mxu0 %v492
    %784 = vmatprep.subr.bf16.mxu0 %v497
    %785 = vmatpush1.bf16.msra.mxu0 %v496
    %786 = vmatprep.subr.bf16.mxu0 %v501
    %787 = vmatpush1.bf16.msra.mxu0 %v500
    %788 = vmatprep.subr.bf16.mxu0 0
    %789 = vmatpush1.bf16.msra.mxu0 0
    %790 = vmatprep.subr.bf16.mxu0 0
    %791 = vmatpush1.bf16.msra.mxu0 0
    %792 = vmatprep.subr.bf16.mxu0 0
    %793 = vmatpush1.bf16.msra.mxu0 0
    %794 = vmatprep.subr.bf16.mxu0 0
    %795 = vmatpush1.bf16.msra.mxu0 0
    %796 = vmatprep.subr.bf16.mxu0 0
    %797 = vmatpush1.bf16.msra.mxu0 0
    %798 = vmatprep.subr.bf16.mxu0 0
    %799 = vmatpush1.bf16.msra.mxu0 0
    %800 = vmatprep.subr.bf16.mxu0 0
    %801 = vmatpush1.bf16.msra.mxu0 0
    %802 = vmatprep.subr.bf16.mxu0 0
    %803 = vmatpush1.bf16.msra.mxu0 0
    %804 = vmatprep.mubr.bf16.mxu0 0
    %805 = vmatmul.mubr.bf16.gmra.mrb[0].mxu0 %v771
    %v806 = vpop.f32.mrb[0].mxu0
    %v807 = vadd.f32 0.0, %v806
    %v808 = vpop.f32.mrb[0].mxu0
    %v809 = vadd.f32 0.0, %v808
    %v810 = vpop.f32.mrb[0].mxu0
    %v811 = vpop.f32.mrb[0].mxu0
    %812 = vdwg.mxu0
    %813 = vmatprep.subr.bf16.mxu0 %v475
    %814 = vmatpush1.bf16.msra.mxu0 %v474
    %815 = vmatprep.subr.bf16.mxu0 %v479
    %816 = vmatpush1.bf16.msra.mxu0 %v478
    %817 = vmatprep.subr.bf16.mxu0 %v483
    %818 = vmatpush1.bf16.msra.mxu0 %v482
    %819 = vmatprep.subr.bf16.mxu0 %v487
    %820 = vmatpush1.bf16.msra.mxu0 %v486
    %821 = vmatprep.subr.bf16.mxu0 %v491
    %822 = vmatpush1.bf16.msra.mxu0 %v490
    %823 = vmatprep.subr.bf16.mxu0 %v495
    %824 = vmatpush1.bf16.msra.mxu0 %v494
    %825 = vmatprep.subr.bf16.mxu0 %v499
    %826 = vmatpush1.bf16.msra.mxu0 %v498
    %827 = vmatprep.subr.bf16.mxu0 %v503
    %828 = vmatpush1.bf16.msra.mxu0 %v502
    %829 = vmatprep.subr.bf16.mxu0 0
    %830 = vmatpush1.bf16.msra.mxu0 0
    %831 = vmatprep.subr.bf16.mxu0 0
    %832 = vmatpush1.bf16.msra.mxu0 0
    %833 = vmatprep.subr.bf16.mxu0 0
    %834 = vmatpush1.bf16.msra.mxu0 0
    %835 = vmatprep.subr.bf16.mxu0 0
    %836 = vmatpush1.bf16.msra.mxu0 0
    %837 = vmatprep.subr.bf16.mxu0 0
    %838 = vmatpush1.bf16.msra.mxu0 0
    %839 = vmatprep.subr.bf16.mxu0 0
    %840 = vmatpush1.bf16.msra.mxu0 0
    %841 = vmatprep.subr.bf16.mxu0 0
    %842 = vmatpush1.bf16.msra.mxu0 0
    %843 = vmatprep.subr.bf16.mxu0 0
    %844 = vmatpush1.bf16.msra.mxu0 0
    %845 = vmatprep.mubr.bf16.mxu0 0
    %846 = vmatmul.mubr.bf16.gmra.mrb[0].mxu0 %v771
    %v847 = vpop.f32.mrb[0].mxu0
    %v848 = vadd.f32 0.0, %v847
    %v849 = vpop.f32.mrb[0].mxu0
    %v850 = vadd.f32 0.0, %v849
    %v851 = vpop.f32.mrb[0].mxu0
    %v852 = vpop.f32.mrb[0].mxu0
    %853 = vdwg.mxu0
    %v854 = vadd.f32 %v767, %v807
    %v855 = vadd.f32 %v768, %v809
    %v856 = vadd.f32 %v769, %v848
    %v857 = vadd.f32 %v770, %v850
    %v858 = vxor.u32 %v854, 2147483648
    %v859 = vmul.f32 %v858, 1.442695
    %v860 = vpow.pop %v859
    %v861 = vadd.f32 %v860, 1.0
    %v862 = vrcp.pop %v861
    %v863 = vmul.f32 1.0, %v862
    %v864 = vxor.u32 %v855, 2147483648
    %v865 = vmul.f32 %v864, 1.442695
    %v866 = vpow.pop %v865
    %v867 = vadd.f32 %v866, 1.0
    %v868 = vrcp.pop %v867
    %v869 = vmul.f32 1.0, %v868
    %v870 = vtanh.pop %v856
    %v871 = vxor.u32 %v857, 2147483648
    %v872 = vmul.f32 %v871, 1.442695
    %v873 = vpow.pop %v872
    %v874 = vadd.f32 %v873, 1.0
    %v875 = vrcp.pop %v874
    %v876 = vmul.f32 1.0, %v875
    %v877 = vmul.f32 %v869, %v761
    %v878 = vmul.f32 %v863, %v870
    %v879 = vadd.f32 %v877, %v878
    %v880 = vtanh.pop %v879
    %v881 = vmul.f32 %v876, %v880
    %s882 = smul.u32 3, 4
    %s883 = smul.addr %s882, 8
    %s884 = scalar_lea.vmem [#allocation2], %s883
    %v885 = vld [vmem:[%s884] sm:$0xff]
    %v886 = vld [vmem:[%s884 + $0x8] sm:$0xff]
    %v887 = vld [vmem:[%s884 + $0x10] sm:$0xff]
    %v888 = vld [vmem:[%s884 + $0x18] sm:$0xff]
    %v889 = vpack.c.bf16 %v881, %v881
    %890 = vmatprep.subr.bf16.mxu0 %v473
    %891 = vmatpush1.bf16.msra.mxu0 %v472
    %892 = vmatprep.subr.bf16.mxu0 %v477
    %893 = vmatpush1.bf16.msra.mxu0 %v476
    %894 = vmatprep.subr.bf16.mxu0 %v481
    %895 = vmatpush1.bf16.msra.mxu0 %v480
    %896 = vmatprep.subr.bf16.mxu0 %v485
    %897 = vmatpush1.bf16.msra.mxu0 %v484
    %898 = vmatprep.subr.bf16.mxu0 %v489
    %899 = vmatpush1.bf16.msra.mxu0 %v488
    %900 = vmatprep.subr.bf16.mxu0 %v493
    %901 = vmatpush1.bf16.msra.mxu0 %v492
    %902 = vmatprep.subr.bf16.mxu0 %v497
    %903 = vmatpush1.bf16.msra.mxu0 %v496
    %904 = vmatprep.subr.bf16.mxu0 %v501
    %905 = vmatpush1.bf16.msra.mxu0 %v500
    %906 = vmatprep.subr.bf16.mxu0 0
    %907 = vmatpush1.bf16.msra.mxu0 0
    %908 = vmatprep.subr.bf16.mxu0 0
    %909 = vmatpush1.bf16.msra.mxu0 0
    %910 = vmatprep.subr.bf16.mxu0 0
    %911 = vmatpush1.bf16.msra.mxu0 0
    %912 = vmatprep.subr.bf16.mxu0 0
    %913 = vmatpush1.bf16.msra.mxu0 0
    %914 = vmatprep.subr.bf16.mxu0 0
    %915 = vmatpush1.bf16.msra.mxu0 0
    %916 = vmatprep.subr.bf16.mxu0 0
    %917 = vmatpush1.bf16.msra.mxu0 0
    %918 = vmatprep.subr.bf16.mxu0 0
    %919 = vmatpush1.bf16.msra.mxu0 0
    %920 = vmatprep.subr.bf16.mxu0 0
    %921 = vmatpush1.bf16.msra.mxu0 0
    %922 = vmatprep.mubr.bf16.mxu0 0
    %923 = vmatmul.mubr.bf16.gmra.mrb[0].mxu0 %v889
    %v924 = vpop.f32.mrb[0].mxu0
    %v925 = vadd.f32 0.0, %v924
    %v926 = vpop.f32.mrb[0].mxu0
    %v927 = vadd.f32 0.0, %v926
    %v928 = vpop.f32.mrb[0].mxu0
    %v929 = vpop.f32.mrb[0].mxu0
    %930 = vdwg.mxu0
    %931 = vmatprep.subr.bf16.mxu0 %v475
    %932 = vmatpush1.bf16.msra.mxu0 %v474
    %933 = vmatprep.subr.bf16.mxu0 %v479
    %934 = vmatpush1.bf16.msra.mxu0 %v478
    %935 = vmatprep.subr.bf16.mxu0 %v483
    %936 = vmatpush1.bf16.msra.mxu0 %v482
    %937 = vmatprep.subr.bf16.mxu0 %v487
    %938 = vmatpush1.bf16.msra.mxu0 %v486
    %939 = vmatprep.subr.bf16.mxu0 %v491
    %940 = vmatpush1.bf16.msra.mxu0 %v490
    %941 = vmatprep.subr.bf16.mxu0 %v495
    %942 = vmatpush1.bf16.msra.mxu0 %v494
    %943 = vmatprep.subr.bf16.mxu0 %v499
    %944 = vmatpush1.bf16.msra.mxu0 %v498
    %945 = vmatprep.subr.bf16.mxu0 %v503
    %946 = vmatpush1.bf16.msra.mxu0 %v502
    %947 = vmatprep.subr.bf16.mxu0 0
    %948 = vmatpush1.bf16.msra.mxu0 0
    %949 = vmatprep.subr.bf16.mxu0 0
    %950 = vmatpush1.bf16.msra.mxu0 0
    %951 = vmatprep.subr.bf16.mxu0 0
    %952 = vmatpush1.bf16.msra.mxu0 0
    %953 = vmatprep.subr.bf16.mxu0 0
    %954 = vmatpush1.bf16.msra.mxu0 0
    %955 = vmatprep.subr.bf16.mxu0 0
    %956 = vmatpush1.bf16.msra.mxu0 0
    %957 = vmatprep.subr.bf16.mxu0 0
    %958 = vmatpush1.bf16.msra.mxu0 0
    %959 = vmatprep.subr.bf16.mxu0 0
    %960 = vmatpush1.bf16.msra.mxu0 0
    %961 = vmatprep.subr.bf16.mxu0 0
    %962 = vmatpush1.bf16.msra.mxu0 0
    %963 = vmatprep.mubr.bf16.mxu0 0
    %964 = vmatmul.mubr.bf16.gmra.mrb[0].mxu0 %v889
    %v965 = vpop.f32.mrb[0].mxu0
    %v966 = vadd.f32 0.0, %v965
    %v967 = vpop.f32.mrb[0].mxu0
    %v968 = vadd.f32 0.0, %v967
    %v969 = vpop.f32.mrb[0].mxu0
    %v970 = vpop.f32.mrb[0].mxu0
    %971 = vdwg.mxu0
    %v972 = vadd.f32 %v885, %v925
    %v973 = vadd.f32 %v886, %v927
    %v974 = vadd.f32 %v887, %v966
    %v975 = vadd.f32 %v888, %v968
    %v976 = vxor.u32 %v972, 2147483648
    %v977 = vmul.f32 %v976, 1.442695
    %v978 = vpow.pop %v977
    %v979 = vadd.f32 %v978, 1.0
    %v980 = vrcp.pop %v979
    %v981 = vmul.f32 1.0, %v980
    %v982 = vxor.u32 %v973, 2147483648
    %v983 = vmul.f32 %v982, 1.442695
    %v984 = vpow.pop %v983
    %v985 = vadd.f32 %v984, 1.0
    %v986 = vrcp.pop %v985
    %v987 = vmul.f32 1.0, %v986
    %v988 = vtanh.pop %v974
    %v989 = vxor.u32 %v975, 2147483648
    %v990 = vmul.f32 %v989, 1.442695
    %v991 = vpow.pop %v990
    %v992 = vadd.f32 %v991, 1.0
    %v993 = vrcp.pop %v992
    %v994 = vmul.f32 1.0, %v993
    %v995 = vmul.f32 %v987, %v879
    %v996 = vmul.f32 %v981, %v988
    %v997 = vadd.f32 %v995, %v996
    %v998 = vtanh.pop %v997
    %v999 = vmul.f32 %v994, %v998
    %s1000 = smul.u32 4, 4
    %s1001 = smul.addr %s1000, 8
    %s1002 = scalar_lea.vmem [#allocation2], %s1001
    %v1003 = vld [vmem:[%s1002] sm:$0xff]
    %v1004 = vld [vmem:[%s1002 + $0x8] sm:$0xff]
    %v1005 = vld [vmem:[%s1002 + $0x10] sm:$0xff]
    %v1006 = vld [vmem:[%s1002 + $0x18] sm:$0xff]
    %v1007 = vpack.c.bf16 %v999, %v999
    %1008 = vmatprep.subr.bf16.mxu0 %v473
    %1009 = vmatpush1.bf16.msra.mxu0 %v472
    %1010 = vmatprep.subr.bf16.mxu0 %v477
    %1011 = vmatpush1.bf16.msra.mxu0 %v476
    %1012 = vmatprep.subr.bf16.mxu0 %v481
    %1013 = vmatpush1.bf16.msra.mxu0 %v480
    %1014 = vmatprep.subr.bf16.mxu0 %v485
    %1015 = vmatpush1.bf16.msra.mxu0 %v484
    %1016 = vmatprep.subr.bf16.mxu0 %v489
    %1017 = vmatpush1.bf16.msra.mxu0 %v488
    %1018 = vmatprep.subr.bf16.mxu0 %v493
    %1019 = vmatpush1.bf16.msra.mxu0 %v492
    %1020 = vmatprep.subr.bf16.mxu0 %v497
    %1021 = vmatpush1.bf16.msra.mxu0 %v496
    %1022 = vmatprep.subr.bf16.mxu0 %v501
    %1023 = vmatpush1.bf16.msra.mxu0 %v500
    %1024 = vmatprep.subr.bf16.mxu0 0
    %1025 = vmatpush1.bf16.msra.mxu0 0
    %1026 = vmatprep.subr.bf16.mxu0 0
    %1027 = vmatpush1.bf16.msra.mxu0 0
    %1028 = vmatprep.subr.bf16.mxu0 0
    %1029 = vmatpush1.bf16.msra.mxu0 0
    %1030 = vmatprep.subr.bf16.mxu0 0
    %1031 = vmatpush1.bf16.msra.mxu0 0
    %1032 = vmatprep.subr.bf16.mxu0 0
    %1033 = vmatpush1.bf16.msra.mxu0 0
    %1034 = vmatprep.subr.bf16.mxu0 0
    %1035 = vmatpush1.bf16.msra.mxu0 0
    %1036 = vmatprep.subr.bf16.mxu0 0
    %1037 = vmatpush1.bf16.msra.mxu0 0
    %1038 = vmatprep.subr.bf16.mxu0 0
    %1039 = vmatpush1.bf16.msra.mxu0 0
    %1040 = vmatprep.mubr.bf16.mxu0 0
    %1041 = vmatmul.mubr.bf16.gmra.mrb[0].mxu0 %v1007
    %v1042 = vpop.f32.mrb[0].mxu0
    %v1043 = vadd.f32 0.0, %v1042
    %v1044 = vpop.f32.mrb[0].mxu0
    %v1045 = vadd.f32 0.0, %v1044
    %v1046 = vpop.f32.mrb[0].mxu0
    %v1047 = vpop.f32.mrb[0].mxu0
    %1048 = vdwg.mxu0
    %1049 = vmatprep.subr.bf16.mxu0 %v475
    %1050 = vmatpush1.bf16.msra.mxu0 %v474
    %1051 = vmatprep.subr.bf16.mxu0 %v479
    %1052 = vmatpush1.bf16.msra.mxu0 %v478
    %1053 = vmatprep.subr.bf16.mxu0 %v483
    %1054 = vmatpush1.bf16.msra.mxu0 %v482
    %1055 = vmatprep.subr.bf16.mxu0 %v487
    %1056 = vmatpush1.bf16.msra.mxu0 %v486
    %1057 = vmatprep.subr.bf16.mxu0 %v491
    %1058 = vmatpush1.bf16.msra.mxu0 %v490
    %1059 = vmatprep.subr.bf16.mxu0 %v495
    %1060 = vmatpush1.bf16.msra.mxu0 %v494
    %1061 = vmatprep.subr.bf16.mxu0 %v499
    %1062 = vmatpush1.bf16.msra.mxu0 %v498
    %1063 = vmatprep.subr.bf16.mxu0 %v503
    %1064 = vmatpush1.bf16.msra.mxu0 %v502
    %1065 = vmatprep.subr.bf16.mxu0 0
    %1066 = vmatpush1.bf16.msra.mxu0 0
    %1067 = vmatprep.subr.bf16.mxu0 0
    %1068 = vmatpush1.bf16.msra.mxu0 0
    %1069 = vmatprep.subr.bf16.mxu0 0
    %1070 = vmatpush1.bf16.msra.mxu0 0
    %1071 = vmatprep.subr.bf16.mxu0 0
    %1072 = vmatpush1.bf16.msra.mxu0 0
    %1073 = vmatprep.subr.bf16.mxu0 0
    %1074 = vmatpush1.bf16.msra.mxu0 0
    %1075 = vmatprep.subr.bf16.mxu0 0
    %1076 = vmatpush1.bf16.msra.mxu0 0
    %1077 = vmatprep.subr.bf16.mxu0 0
    %1078 = vmatpush1.bf16.msra.mxu0 0
    %1079 = vmatprep.subr.bf16.mxu0 0
    %1080 = vmatpush1.bf16.msra.mxu0 0
    %1081 = vmatprep.mubr.bf16.mxu0 0
    %1082 = vmatmul.mubr.bf16.gmra.mrb[0].mxu0 %v1007
    %v1083 = vpop.f32.mrb[0].mxu0
    %v1084 = vadd.f32 0.0, %v1083
    %v1085 = vpop.f32.mrb[0].mxu0
    %v1086 = vadd.f32 0.0, %v1085
    %v1087 = vpop.f32.mrb[0].mxu0
    %v1088 = vpop.f32.mrb[0].mxu0
    %1089 = vdwg.mxu0
    %v1090 = vadd.f32 %v1003, %v1043
    %v1091 = vadd.f32 %v1004, %v1045
    %v1092 = vadd.f32 %v1005, %v1084
    %v1093 = vadd.f32 %v1006, %v1086
    %v1094 = vxor.u32 %v1090, 2147483648
    %v1095 = vmul.f32 %v1094, 1.442695
    %v1096 = vpow.pop %v1095
    %v1097 = vadd.f32 %v1096, 1.0
    %v1098 = vrcp.pop %v1097
    %v1099 = vmul.f32 1.0, %v1098
    %v1100 = vxor.u32 %v1091, 2147483648
    %v1101 = vmul.f32 %v1100, 1.442695
    %v1102 = vpow.pop %v1101
    %v1103 = vadd.f32 %v1102, 1.0
    %v1104 = vrcp.pop %v1103
    %v1105 = vmul.f32 1.0, %v1104
    %v1106 = vtanh.pop %v1092
    %v1107 = vxor.u32 %v1093, 2147483648
    %v1108 = vmul.f32 %v1107, 1.442695
    %v1109 = vpow.pop %v1108
    %v1110 = vadd.f32 %v1109, 1.0
    %v1111 = vrcp.pop %v1110
    %v1112 = vmul.f32 1.0, %v1111
    %v1113 = vmul.f32 %v1105, %v997
    %v1114 = vmul.f32 %v1099, %v1106
    %v1115 = vadd.f32 %v1113, %v1114
    %v1116 = vtanh.pop %v1115
    %v1117 = vmul.f32 %v1112, %v1116
    %s1118 = smul.u32 5, 4
    %s1119 = smul.addr %s1118, 8
    %s1120 = scalar_lea.vmem [#allocation2], %s1119
    %v1121 = vld [vmem:[%s1120] sm:$0xff]
    %v1122 = vld [vmem:[%s1120 + $0x8] sm:$0xff]
    %v1123 = vld [vmem:[%s1120 + $0x10] sm:$0xff]
    %v1124 = vld [vmem:[%s1120 + $0x18] sm:$0xff]
    %v1125 = vpack.c.bf16 %v1117, %v1117
    %1126 = vmatprep.subr.bf16.mxu0 %v473
    %1127 = vmatpush1.bf16.msra.mxu0 %v472
    %1128 = vmatprep.subr.bf16.mxu0 %v477
    %1129 = vmatpush1.bf16.msra.mxu0 %v476
    %1130 = vmatprep.subr.bf16.mxu0 %v481
    %1131 = vmatpush1.bf16.msra.mxu0 %v480
    %1132 = vmatprep.subr.bf16.mxu0 %v485
    %1133 = vmatpush1.bf16.msra.mxu0 %v484
    %1134 = vmatprep.subr.bf16.mxu0 %v489
    %1135 = vmatpush1.bf16.msra.mxu0 %v488
    %1136 = vmatprep.subr.bf16.mxu0 %v493
    %1137 = vmatpush1.bf16.msra.mxu0 %v492
    %1138 = vmatprep.subr.bf16.mxu0 %v497
    %1139 = vmatpush1.bf16.msra.mxu0 %v496
    %1140 = vmatprep.subr.bf16.mxu0 %v501
    %1141 = vmatpush1.bf16.msra.mxu0 %v500
    %1142 = vmatprep.subr.bf16.mxu0 0
    %1143 = vmatpush1.bf16.msra.mxu0 0
    %1144 = vmatprep.subr.bf16.mxu0 0
    %1145 = vmatpush1.bf16.msra.mxu0 0
    %1146 = vmatprep.subr.bf16.mxu0 0
    %1147 = vmatpush1.bf16.msra.mxu0 0
    %1148 = vmatprep.subr.bf16.mxu0 0
    %1149 = vmatpush1.bf16.msra.mxu0 0
    %1150 = vmatprep.subr.bf16.mxu0 0
    %1151 = vmatpush1.bf16.msra.mxu0 0
    %1152 = vmatprep.subr.bf16.mxu0 0
    %1153 = vmatpush1.bf16.msra.mxu0 0
    %1154 = vmatprep.subr.bf16.mxu0 0
    %1155 = vmatpush1.bf16.msra.mxu0 0
    %1156 = vmatprep.subr.bf16.mxu0 0
    %1157 = vmatpush1.bf16.msra.mxu0 0
    %1158 = vmatprep.mubr.bf16.mxu0 0
    %1159 = vmatmul.mubr.bf16.gmra.mrb[0].mxu0 %v1125
    %v1160 = vpop.f32.mrb[0].mxu0
    %v1161 = vadd.f32 0.0, %v1160
    %v1162 = vpop.f32.mrb[0].mxu0
    %v1163 = vadd.f32 0.0, %v1162
    %v1164 = vpop.f32.mrb[0].mxu0
    %v1165 = vpop.f32.mrb[0].mxu0
    %1166 = vdwg.mxu0
    %1167 = vmatprep.subr.bf16.mxu0 %v475
    %1168 = vmatpush1.bf16.msra.mxu0 %v474
    %1169 = vmatprep.subr.bf16.mxu0 %v479
    %1170 = vmatpush1.bf16.msra.mxu0 %v478
    %1171 = vmatprep.subr.bf16.mxu0 %v483
    %1172 = vmatpush1.bf16.msra.mxu0 %v482
    %1173 = vmatprep.subr.bf16.mxu0 %v487
    %1174 = vmatpush1.bf16.msra.mxu0 %v486
    %1175 = vmatprep.subr.bf16.mxu0 %v491
    %1176 = vmatpush1.bf16.msra.mxu0 %v490
    %1177 = vmatprep.subr.bf16.mxu0 %v495
    %1178 = vmatpush1.bf16.msra.mxu0 %v494
    %1179 = vmatprep.subr.bf16.mxu0 %v499
    %1180 = vmatpush1.bf16.msra.mxu0 %v498
    %1181 = vmatprep.subr.bf16.mxu0 %v503
    %1182 = vmatpush1.bf16.msra.mxu0 %v502
    %1183 = vmatprep.subr.bf16.mxu0 0
    %1184 = vmatpush1.bf16.msra.mxu0 0
    %1185 = vmatprep.subr.bf16.mxu0 0
    %1186 = vmatpush1.bf16.msra.mxu0 0
    %1187 = vmatprep.subr.bf16.mxu0 0
    %1188 = vmatpush1.bf16.msra.mxu0 0
    %1189 = vmatprep.subr.bf16.mxu0 0
    %1190 = vmatpush1.bf16.msra.mxu0 0
    %1191 = vmatprep.subr.bf16.mxu0 0
    %1192 = vmatpush1.bf16.msra.mxu0 0
    %1193 = vmatprep.subr.bf16.mxu0 0
    %1194 = vmatpush1.bf16.msra.mxu0 0
    %1195 = vmatprep.subr.bf16.mxu0 0
    %1196 = vmatpush1.bf16.msra.mxu0 0
    %1197 = vmatprep.subr.bf16.mxu0 0
    %1198 = vmatpush1.bf16.msra.mxu0 0
    %1199 = vmatprep.mubr.bf16.mxu0 0
    %1200 = vmatmul.mubr.bf16.gmra.mrb[0].mxu0 %v1125
    %v1201 = vpop.f32.mrb[0].mxu0
    %v1202 = vadd.f32 0.0, %v1201
    %v1203 = vpop.f32.mrb[0].mxu0
    %v1204 = vadd.f32 0.0, %v1203
    %v1205 = vpop.f32.mrb[0].mxu0
    %v1206 = vpop.f32.mrb[0].mxu0
    %1207 = vdwg.mxu0
    %v1208 = vadd.f32 %v1121, %v1161
    %v1209 = vadd.f32 %v1122, %v1163
    %v1210 = vadd.f32 %v1123, %v1202
    %v1211 = vadd.f32 %v1124, %v1204
    %v1212 = vxor.u32 %v1208, 2147483648
    %v1213 = vmul.f32 %v1212, 1.442695
    %v1214 = vpow.pop %v1213
    %v1215 = vadd.f32 %v1214, 1.0
    %v1216 = vrcp.pop %v1215
    %v1217 = vmul.f32 1.0, %v1216
    %v1218 = vxor.u32 %v1209, 2147483648
    %v1219 = vmul.f32 %v1218, 1.442695
    %v1220 = vpow.pop %v1219
    %v1221 = vadd.f32 %v1220, 1.0
    %v1222 = vrcp.pop %v1221
    %v1223 = vmul.f32 1.0, %v1222
    %v1224 = vtanh.pop %v1210
    %v1225 = vxor.u32 %v1211, 2147483648
    %v1226 = vmul.f32 %v1225, 1.442695
    %v1227 = vpow.pop %v1226
    %v1228 = vadd.f32 %v1227, 1.0
    %v1229 = vrcp.pop %v1228
    %v1230 = vmul.f32 1.0, %v1229
    %v1231 = vmul.f32 %v1223, %v1115
    %v1232 = vmul.f32 %v1217, %v1224
    %v1233 = vadd.f32 %v1231, %v1232
    %v1234 = vtanh.pop %v1233
    %v1235 = vmul.f32 %v1230, %v1234
    %s1236 = smul.u32 6, 4
    %s1237 = smul.addr %s1236, 8
    %s1238 = scalar_lea.vmem [#allocation2], %s1237
    %v1239 = vld [vmem:[%s1238] sm:$0xff]
    %v1240 = vld [vmem:[%s1238 + $0x8] sm:$0xff]
    %v1241 = vld [vmem:[%s1238 + $0x10] sm:$0xff]
    %v1242 = vld [vmem:[%s1238 + $0x18] sm:$0xff]
    %v1243 = vpack.c.bf16 %v1235, %v1235
    %1244 = vmatprep.subr.bf16.mxu0 %v473
    %1245 = vmatpush1.bf16.msra.mxu0 %v472
    %1246 = vmatprep.subr.bf16.mxu0 %v477
    %1247 = vmatpush1.bf16.msra.mxu0 %v476
    %1248 = vmatprep.subr.bf16.mxu0 %v481
    %1249 = vmatpush1.bf16.msra.mxu0 %v480
    %1250 = vmatprep.subr.bf16.mxu0 %v485
    %1251 = vmatpush1.bf16.msra.mxu0 %v484
    %1252 = vmatprep.subr.bf16.mxu0 %v489
    %1253 = vmatpush1.bf16.msra.mxu0 %v488
    %1254 = vmatprep.subr.bf16.mxu0 %v493
    %1255 = vmatpush1.bf16.msra.mxu0 %v492
    %1256 = vmatprep.subr.bf16.mxu0 %v497
    %1257 = vmatpush1.bf16.msra.mxu0 %v496
    %1258 = vmatprep.subr.bf16.mxu0 %v501
    %1259 = vmatpush1.bf16.msra.mxu0 %v500
    %1260 = vmatprep.subr.bf16.mxu0 0
    %1261 = vmatpush1.bf16.msra.mxu0 0
    %1262 = vmatprep.subr.bf16.mxu0 0
    %1263 = vmatpush1.bf16.msra.mxu0 0
    %1264 = vmatprep.subr.bf16.mxu0 0
    %1265 = vmatpush1.bf16.msra.mxu0 0
    %1266 = vmatprep.subr.bf16.mxu0 0
    %1267 = vmatpush1.bf16.msra.mxu0 0
    %1268 = vmatprep.subr.bf16.mxu0 0
    %1269 = vmatpush1.bf16.msra.mxu0 0
    %1270 = vmatprep.subr.bf16.mxu0 0
    %1271 = vmatpush1.bf16.msra.mxu0 0
    %1272 = vmatprep.subr.bf16.mxu0 0
    %1273 = vmatpush1.bf16.msra.mxu0 0
    %1274 = vmatprep.subr.bf16.mxu0 0
    %1275 = vmatpush1.bf16.msra.mxu0 0
    %1276 = vmatprep.mubr.bf16.mxu0 0
    %1277 = vmatmul.mubr.bf16.gmra.mrb[0].mxu0 %v1243
    %v1278 = vpop.f32.mrb[0].mxu0
    %v1279 = vadd.f32 0.0, %v1278
    %v1280 = vpop.f32.mrb[0].mxu0
    %v1281 = vadd.f32 0.0, %v1280
    %v1282 = vpop.f32.mrb[0].mxu0
    %v1283 = vpop.f32.mrb[0].mxu0
    %1284 = vdwg.mxu0
    %1285 = vmatprep.subr.bf16.mxu0 %v475
    %1286 = vmatpush1.bf16.msra.mxu0 %v474
    %1287 = vmatprep.subr.bf16.mxu0 %v479
    %1288 = vmatpush1.bf16.msra.mxu0 %v478
    %1289 = vmatprep.subr.bf16.mxu0 %v483
    %1290 = vmatpush1.bf16.msra.mxu0 %v482
    %1291 = vmatprep.subr.bf16.mxu0 %v487
    %1292 = vmatpush1.bf16.msra.mxu0 %v486
    %1293 = vmatprep.subr.bf16.mxu0 %v491
    %1294 = vmatpush1.bf16.msra.mxu0 %v490
    %1295 = vmatprep.subr.bf16.mxu0 %v495
    %1296 = vmatpush1.bf16.msra.mxu0 %v494
    %1297 = vmatprep.subr.bf16.mxu0 %v499
    %1298 = vmatpush1.bf16.msra.mxu0 %v498
    %1299 = vmatprep.subr.bf16.mxu0 %v503
    %1300 = vmatpush1.bf16.msra.mxu0 %v502
    %1301 = vmatprep.subr.bf16.mxu0 0
    %1302 = vmatpush1.bf16.msra.mxu0 0
    %1303 = vmatprep.subr.bf16.mxu0 0
    %1304 = vmatpush1.bf16.msra.mxu0 0
    %1305 = vmatprep.subr.bf16.mxu0 0
    %1306 = vmatpush1.bf16.msra.mxu0 0
    %1307 = vmatprep.subr.bf16.mxu0 0
    %1308 = vmatpush1.bf16.msra.mxu0 0
    %1309 = vmatprep.subr.bf16.mxu0 0
    %1310 = vmatpush1.bf16.msra.mxu0 0
    %1311 = vmatprep.subr.bf16.mxu0 0
    %1312 = vmatpush1.bf16.msra.mxu0 0
    %1313 = vmatprep.subr.bf16.mxu0 0
    %1314 = vmatpush1.bf16.msra.mxu0 0
    %1315 = vmatprep.subr.bf16.mxu0 0
    %1316 = vmatpush1.bf16.msra.mxu0 0
    %1317 = vmatprep.mubr.bf16.mxu0 0
    %1318 = vmatmul.mubr.bf16.gmra.mrb[0].mxu0 %v1243
    %v1319 = vpop.f32.mrb[0].mxu0
    %v1320 = vadd.f32 0.0, %v1319
    %v1321 = vpop.f32.mrb[0].mxu0
    %v1322 = vadd.f32 0.0, %v1321
    %v1323 = vpop.f32.mrb[0].mxu0
    %v1324 = vpop.f32.mrb[0].mxu0
    %1325 = vdwg.mxu0
    %v1326 = vadd.f32 %v1239, %v1279
    %v1327 = vadd.f32 %v1240, %v1281
    %v1328 = vadd.f32 %v1241, %v1320
    %v1329 = vadd.f32 %v1242, %v1322
    %v1330 = vxor.u32 %v1326, 2147483648
    %v1331 = vmul.f32 %v1330, 1.442695
    %v1332 = vpow.pop %v1331
    %v1333 = vadd.f32 %v1332, 1.0
    %v1334 = vrcp.pop %v1333
    %v1335 = vmul.f32 1.0, %v1334
    %v1336 = vxor.u32 %v1327, 2147483648
    %v1337 = vmul.f32 %v1336, 1.442695
    %v1338 = vpow.pop %v1337
    %v1339 = vadd.f32 %v1338, 1.0
    %v1340 = vrcp.pop %v1339
    %v1341 = vmul.f32 1.0, %v1340
    %v1342 = vtanh.pop %v1328
    %v1343 = vxor.u32 %v1329, 2147483648
    %v1344 = vmul.f32 %v1343, 1.442695
    %v1345 = vpow.pop %v1344
    %v1346 = vadd.f32 %v1345, 1.0
    %v1347 = vrcp.pop %v1346
    %v1348 = vmul.f32 1.0, %v1347
    %v1349 = vmul.f32 %v1341, %v1233
    %v1350 = vmul.f32 %v1335, %v1342
    %v1351 = vadd.f32 %v1349, %v1350
    %v1352 = vtanh.pop %v1351
    %v1353 = vmul.f32 %v1348, %v1352
    %s1354 = smul.u32 7, 4
    %s1355 = smul.addr %s1354, 8
    %s1356 = scalar_lea.vmem [#allocation2], %s1355
    %v1357 = vld [vmem:[%s1356] sm:$0xff]
    %v1358 = vld [vmem:[%s1356 + $0x8] sm:$0xff]
    %v1359 = vld [vmem:[%s1356 + $0x10] sm:$0xff]
    %v1360 = vld [vmem:[%s1356 + $0x18] sm:$0xff]
    %v1361 = vpack.c.bf16 %v1353, %v1353
    %1362 = vmatprep.subr.bf16.mxu0 %v473
    %1363 = vmatpush1.bf16.msra.mxu0 %v472
    %1364 = vmatprep.subr.bf16.mxu0 %v477
    %1365 = vmatpush1.bf16.msra.mxu0 %v476
    %1366 = vmatprep.subr.bf16.mxu0 %v481
    %1367 = vmatpush1.bf16.msra.mxu0 %v480
    %1368 = vmatprep.subr.bf16.mxu0 %v485
    %1369 = vmatpush1.bf16.msra.mxu0 %v484
    %1370 = vmatprep.subr.bf16.mxu0 %v489
    %1371 = vmatpush1.bf16.msra.mxu0 %v488
    %1372 = vmatprep.subr.bf16.mxu0 %v493
    %1373 = vmatpush1.bf16.msra.mxu0 %v492
    %1374 = vmatprep.subr.bf16.mxu0 %v497
    %1375 = vmatpush1.bf16.msra.mxu0 %v496
    %1376 = vmatprep.subr.bf16.mxu0 %v501
    %1377 = vmatpush1.bf16.msra.mxu0 %v500
    %1378 = vmatprep.subr.bf16.mxu0 0
    %1379 = vmatpush1.bf16.msra.mxu0 0
    %1380 = vmatprep.subr.bf16.mxu0 0
    %1381 = vmatpush1.bf16.msra.mxu0 0
    %1382 = vmatprep.subr.bf16.mxu0 0
    %1383 = vmatpush1.bf16.msra.mxu0 0
    %1384 = vmatprep.subr.bf16.mxu0 0
    %1385 = vmatpush1.bf16.msra.mxu0 0
    %1386 = vmatprep.subr.bf16.mxu0 0
    %1387 = vmatpush1.bf16.msra.mxu0 0
    %1388 = vmatprep.subr.bf16.mxu0 0
    %1389 = vmatpush1.bf16.msra.mxu0 0
    %1390 = vmatprep.subr.bf16.mxu0 0
    %1391 = vmatpush1.bf16.msra.mxu0 0
    %1392 = vmatprep.subr.bf16.mxu0 0
    %1393 = vmatpush1.bf16.msra.mxu0 0
    %1394 = vmatprep.mubr.bf16.mxu0 0
    %1395 = vmatmul.mubr.bf16.gmra.mrb[0].mxu0 %v1361
    %v1396 = vpop.f32.mrb[0].mxu0
    %v1397 = vadd.f32 0.0, %v1396
    %v1398 = vpop.f32.mrb[0].mxu0
    %v1399 = vadd.f32 0.0, %v1398
    %v1400 = vpop.f32.mrb[0].mxu0
    %v1401 = vpop.f32.mrb[0].mxu0
    %1402 = vdwg.mxu0
    %1403 = vmatprep.subr.bf16.mxu0 %v475
    %1404 = vmatpush1.bf16.msra.mxu0 %v474
    %1405 = vmatprep.subr.bf16.mxu0 %v479
    %1406 = vmatpush1.bf16.msra.mxu0 %v478
    %1407 = vmatprep.subr.bf16.mxu0 %v483
    %1408 = vmatpush1.bf16.msra.mxu0 %v482
    %1409 = vmatprep.subr.bf16.mxu0 %v487
    %1410 = vmatpush1.bf16.msra.mxu0 %v486
    %1411 = vmatprep.subr.bf16.mxu0 %v491
    %1412 = vmatpush1.bf16.msra.mxu0 %v490
    %1413 = vmatprep.subr.bf16.mxu0 %v495
    %1414 = vmatpush1.bf16.msra.mxu0 %v494
    %1415 = vmatprep.subr.bf16.mxu0 %v499
    %1416 = vmatpush1.bf16.msra.mxu0 %v498
    %1417 = vmatprep.subr.bf16.mxu0 %v503
    %1418 = vmatpush1.bf16.msra.mxu0 %v502
    %1419 = vmatprep.subr.bf16.mxu0 0
    %1420 = vmatpush1.bf16.msra.mxu0 0
    %1421 = vmatprep.subr.bf16.mxu0 0
    %1422 = vmatpush1.bf16.msra.mxu0 0
    %1423 = vmatprep.subr.bf16.mxu0 0
    %1424 = vmatpush1.bf16.msra.mxu0 0
    %1425 = vmatprep.subr.bf16.mxu0 0
    %1426 = vmatpush1.bf16.msra.mxu0 0
    %1427 = vmatprep.subr.bf16.mxu0 0
    %1428 = vmatpush1.bf16.msra.mxu0 0
    %1429 = vmatprep.subr.bf16.mxu0 0
    %1430 = vmatpush1.bf16.msra.mxu0 0
    %1431 = vmatprep.subr.bf16.mxu0 0
    %1432 = vmatpush1.bf16.msra.mxu0 0
    %1433 = vmatprep.subr.bf16.mxu0 0
    %1434 = vmatpush1.bf16.msra.mxu0 0
    %1435 = vmatprep.mubr.bf16.mxu0 0
    %1436 = vmatmul.mubr.bf16.gmra.mrb[0].mxu0 %v1361
    %v1437 = vpop.f32.mrb[0].mxu0
    %v1438 = vadd.f32 0.0, %v1437
    %v1439 = vpop.f32.mrb[0].mxu0
    %v1440 = vadd.f32 0.0, %v1439
    %v1441 = vpop.f32.mrb[0].mxu0
    %v1442 = vpop.f32.mrb[0].mxu0
    %1443 = vdwg.mxu0
    %v1444 = vadd.f32 %v1357, %v1397
    %v1445 = vadd.f32 %v1358, %v1399
    %v1446 = vadd.f32 %v1359, %v1438
    %v1447 = vadd.f32 %v1360, %v1440
    %v1448 = vxor.u32 %v1444, 2147483648
    %v1449 = vmul.f32 %v1448, 1.442695
    %v1450 = vpow.pop %v1449
    %v1451 = vadd.f32 %v1450, 1.0
    %v1452 = vrcp.pop %v1451
    %v1453 = vmul.f32 1.0, %v1452
    %v1454 = vxor.u32 %v1445, 2147483648
    %v1455 = vmul.f32 %v1454, 1.442695
    %v1456 = vpow.pop %v1455
    %v1457 = vadd.f32 %v1456, 1.0
    %v1458 = vrcp.pop %v1457
    %v1459 = vmul.f32 1.0, %v1458
    %v1460 = vtanh.pop %v1446
    %v1461 = vxor.u32 %v1447, 2147483648
    %v1462 = vmul.f32 %v1461, 1.442695
    %v1463 = vpow.pop %v1462
    %v1464 = vadd.f32 %v1463, 1.0
    %v1465 = vrcp.pop %v1464
    %v1466 = vmul.f32 1.0, %v1465
    %v1467 = vmul.f32 %v1459, %v1351
    %v1468 = vmul.f32 %v1453, %v1460
    %v1469 = vadd.f32 %v1467, %v1468
    %v1470 = vtanh.pop %v1469
    %v1471 = vmul.f32 %v1466, %v1470
    %1472 = vst [vmem:[#allocation11] sm:$0xff] %v1471
    // Predicated region
    $region34: #{tpu_custom_call.1} parent=1 // pred_check
      _
    $region35: #{tpu_custom_call.1} parent=1 // pred_check_branch
      %1474 = sbr.rel (0) target = $region37
    $region36: #{tpu_custom_call.1} parent=1 // pred_region
      %s1476 = ssub.s32 128, 128
      %1477 = vsyncadd [#allocation5], %s1476
      %s1479 = sshll.u32 [#allocation11], 4
      %s1480 = int_to_ptr.vmem [resolvable:$true] %s1479
      %1482 = dma.vmem_to_hbm [thread:$0]  %s1480, 128, %s4, [#allocation5]
    $region37: #{tpu_custom_call.1} parent=1 // pred_fallthru
      _
    // Predicated region
    $region38: #{tpu_custom_call.1} parent=1 // pred_check
      _
    $region39: #{tpu_custom_call.1} parent=1 // pred_check_branch
      %1484 = sbr.rel (0) target = $region41
    $region40: #{tpu_custom_call.1} parent=1 // pred_region
      %1485 = dma.done [#allocation5], 128
    $region41: #{tpu_custom_call.1} parent=1 // pred_fallthru
      _
    %1486 = vsyncpa [#allocation4], 1
    %1487 = vsyncpa [#allocation7], 1
    %1488 = vsyncpa [#allocation10], 1
    %1489 = vsyncpa [#allocation5], 1

</llo_original>
